<compile_context>
chip_gen: v6e
topology: v6e:2x2x1
jax: 0.10.0
libtpu: 0.0.40
codegen_flags: <defaults>
</compile_context>

<pallas_src>
import functools

import jax
import jax.numpy as jnp
from jax.experimental import pallas as pl
from jax.experimental.pallas import tpu as pltpu


def _layer_norm(x, w, b, eps=1e-5):
    mu = jnp.mean(x, axis=-1, keepdims=True)
    var = jnp.mean((x - mu) ** 2, axis=-1, keepdims=True)  # biased, like torch LayerNorm
    return (x - mu) * jax.lax.rsqrt(var + eps) * w + b


def encoder_layer_kernel(x_ref, pos_ref,
                         wqk_ref, bqk_ref, wv_ref, bv_ref,
                         wo_ref, bo_ref,
                         ln1_w_ref, ln1_b_ref,
                         w1_ref, b1_ref, w2_ref, b2_ref,
                         ln2_w_ref, ln2_b_ref,
                         o_ref,
                         q_scr, k_scr, v_scr, attn_scr,
                         *, num_heads):
    x = x_ref[0]                       # (S, E) f32
    pos = pos_ref[0]                   # (S, E) f32
    S, E = x.shape
    H = num_heads
    hd = E // H

    qk_in = (x + pos).astype(jnp.bfloat16)    # q = k = x + pos_embed
    x_bf = x.astype(jnp.bfloat16)             # v = x

    # ---- Fused, lane-dense input projections (MXU-friendly shapes) --------
    # (S,E)@(E,2E) for Q|K (scale already folded into the Q half) and
    # (S,E)@(E,E) for V; f32 accumulation, biases added in f32.
    qk = jnp.dot(qk_in, wqk_ref[...], preferred_element_type=jnp.float32) + bqk_ref[0]
    v = jnp.dot(x_bf, wv_ref[...], preferred_element_type=jnp.float32) + bv_ref[0]

    # ---- Head split: cheap static layout loop into head-major scratch -----
    # (so the heavy loop below can index whole heads with a dynamic first-axis
    # index instead of dynamic lane slices).
    for h in range(H):
        lo = h * hd
        q_scr[h] = qk[:, lo:lo + hd].astype(jnp.bfloat16)
        k_scr[h] = qk[:, E + lo:E + lo + hd].astype(jnp.bfloat16)
        v_scr[h] = v[:, lo:lo + hd].astype(jnp.bfloat16)

    # ---- Per-head attention with bounded live ranges -----------------------
    def head_body(h, carry):
        qh = q_scr[h]                  # (S, hd) bf16
        kh = k_scr[h]
        vh = v_scr[h]
        # scores (S, S) in f32; 1/sqrt(hd) already folded into Wq/bq.
        s = jax.lax.dot_general(qh, kh, (((1,), (1,)), ((), ())),
                                preferred_element_type=jnp.float32)
        s = s - jnp.max(s, axis=-1, keepdims=True)
        p = jnp.exp(s)                 # unnormalized probs, f32
        denom = jnp.sum(p, axis=-1, keepdims=True)      # (S, 1) f32
        # TODO(synk): attention-weight dropout omitted (identity in eval mode).
        oh = jnp.dot(p.astype(jnp.bfloat16), vh,
                     preferred_element_type=jnp.float32)          # (S, hd)
        # Deferred softmax normalization on the small (S, hd) output.
        oh = oh * pl.reciprocal(denom, approx=True)
        attn_scr[h] = oh.astype(jnp.bfloat16)
        return carry

    jax.lax.fori_loop(0, H, head_body, 0)

    # ---- Fused output projection: lane-concat heads, one dense matmul -----
    attn_cat = jnp.concatenate([attn_scr[h] for h in range(H)], axis=-1)  # (S, E) bf16
    attn = jnp.dot(attn_cat, wo_ref[...],
                   preferred_element_type=jnp.float32) + bo_ref[0]

    # residual + dropout1(identity) + LayerNorm1  (f32)
    x1 = _layer_norm(x + attn, ln1_w_ref[0], ln1_b_ref[0])

    # FFN: Linear -> ReLU -> (dropout) -> Linear -> (dropout)
    # TODO(synk): chunk the F dimension for v7x-sized VMEM at real DETR shapes.
    h1 = jnp.dot(x1.astype(jnp.bfloat16), w1_ref[...],
                 preferred_element_type=jnp.float32) + b1_ref[0]
    h1 = jnp.maximum(h1, 0.0)
    f = jnp.dot(h1.astype(jnp.bfloat16), w2_ref[...],
                preferred_element_type=jnp.float32) + b2_ref[0]

    # residual + dropout2(identity) + LayerNorm2  (f32)
    o_ref[0] = _layer_norm(x1 + f, ln2_w_ref[0], ln2_b_ref[0])


def _prepare_params(params, num_heads):
    """One-time wrapper-side layout plumbing: fuse Q|K weights, transpose all
    matmul weights to (in, out) layout, fold the attention scale into Wq/bq,
    and cast matmul weights to bf16 (biases / LayerNorm params stay f32)."""
    E = params["out_w"].shape[0]
    hd = E // num_heads
    scale = 1.0 / float(hd) ** 0.5

    in_w = params["in_w"]              # (3E, E) packed [Wq; Wk; Wv], rows = out features
    in_b = params["in_b"][0]           # (3E,)

    wq_t = (in_w[:E] * scale).T        # (E, E), scale folded in
    wk_t = in_w[E:2 * E].T
    wv_t = in_w[2 * E:].T

    wqk = jnp.concatenate([wq_t, wk_t], axis=1).astype(jnp.bfloat16)      # (E, 2E)
    bqk = jnp.concatenate([in_b[:E] * scale, in_b[E:2 * E]]).reshape(1, 2 * E)
    wv = wv_t.astype(jnp.bfloat16)                                        # (E, E)
    bv = in_b[2 * E:].reshape(1, E)

    wo = params["out_w"].T.astype(jnp.bfloat16)                           # (E, E)
    w1 = params["w1"].T.astype(jnp.bfloat16)                              # (E, F)
    w2 = params["w2"].T.astype(jnp.bfloat16)                              # (F, E)

    return dict(wqk=wqk, bqk=bqk, wv=wv, bv=bv,
                wo=wo, bo=params["out_b"],
                ln1_w=params["ln1_w"], ln1_b=params["ln1_b"],
                w1=w1, b1=params["b1"], w2=w2, b2=params["b2"],
                ln2_w=params["ln2_w"], ln2_b=params["ln2_b"])


def _pick_vmem_limit():
    """48 MiB on 64-MiB-VMEM parts (v7x), 96 MiB on 128-MiB parts (v5e/v6e)."""
    try:
        cap = pltpu.get_tpu_info().vmem_capacity_bytes
    except Exception:
        return 48 * 1024 * 1024
    if cap <= 64 * 1024 * 1024:
        return 48 * 1024 * 1024
    return 96 * 1024 * 1024


def transformer_encoder_layer(x_sbe, pos_sbe, params, num_heads):
    S, B, E = x_sbe.shape
    H = num_heads
    hd = E // H
    Fdim = params["w1"].shape[0]

    prm = _prepare_params(params, num_heads)

    x = jnp.transpose(x_sbe, (1, 0, 2))     # (B, S, E)
    pos = jnp.transpose(pos_sbe, (1, 0, 2))

    def full(shape):
        return pl.BlockSpec(shape, lambda b: (0,) * len(shape))

    grid_spec = pltpu.PrefetchScalarGridSpec(
        num_scalar_prefetch=0,
        grid=(B,),
        in_specs=[
            pl.BlockSpec((1, S, E), lambda b: (b, 0, 0)),            # x
            pl.BlockSpec((1, S, E), lambda b: (b, 0, 0)),            # pos_embed
            full((E, 2 * E)), full((1, 2 * E)),                      # fused Wq|Wk, bq|bk
            full((E, E)), full((1, E)),                              # Wv, bv
            full((E, E)), full((1, E)),                              # out_proj W, b
            full((1, E)), full((1, E)),                              # norm1 w, b
            full((E, Fdim)), full((1, Fdim)),                        # ffn linear1
            full((Fdim, E)), full((1, E)),                           # ffn linear2
            full((1, E)), full((1, E)),                              # norm2 w, b
        ],
        out_specs=pl.BlockSpec((1, S, E), lambda b: (b, 0, 0)),
        scratch_shapes=[
            pltpu.VMEM((H, S, hd), jnp.bfloat16),   # per-head Q
            pltpu.VMEM((H, S, hd), jnp.bfloat16),   # per-head K
            pltpu.VMEM((H, S, hd), jnp.bfloat16),   # per-head V
            pltpu.VMEM((H, S, hd), jnp.bfloat16),   # per-head attention output
        ],
    )

    out = pl.pallas_call(
        functools.partial(encoder_layer_kernel, num_heads=num_heads),
        out_shape=jax.ShapeDtypeStruct((B, S, E), jnp.float32),
        grid_spec=grid_spec,
        compiler_params=pltpu.CompilerParams(
            dimension_semantics=("parallel",),
            vmem_limit_bytes=_pick_vmem_limit()),
    )(x, pos,
      prm["wqk"], prm["bqk"], prm["wv"], prm["bv"],
      prm["wo"], prm["bo"],
      prm["ln1_w"], prm["ln1_b"],
      prm["w1"], prm["b1"], prm["w2"], prm["b2"],
      prm["ln2_w"], prm["ln2_b"])

    return jnp.transpose(out, (1, 0, 2))    # back to (S, B, E)


def reference(x_sbe, pos_sbe, p, num_heads):
    """Pure-JAX f32 reference mirroring PyTorch eval-mode semantics."""
    x = jnp.transpose(x_sbe, (1, 0, 2))     # (B, S, E)
    pos = jnp.transpose(pos_sbe, (1, 0, 2))
    B, S, E = x.shape
    hd = E // num_heads
    scale = 1.0 / float(hd) ** 0.5

    qk_in = x + pos
    Wq, Wk, Wv = p["in_w"][:E], p["in_w"][E:2 * E], p["in_w"][2 * E:]
    bq, bk, bv = p["in_b"][0, :E], p["in_b"][0, E:2 * E], p["in_b"][0, 2 * E:]
    q = qk_in @ Wq.T + bq
    k = qk_in @ Wk.T + bk
    v = x @ Wv.T + bv
    q = q.reshape(B, S, num_heads, hd)
    k = k.reshape(B, S, num_heads, hd)
    v = v.reshape(B, S, num_heads, hd)
    s = jnp.einsum("bqhd,bkhd->bhqk", q * scale, k)
    a = jax.nn.softmax(s, axis=-1)
    o = jnp.einsum("bhqk,bkhd->bqhd", a, v).reshape(B, S, E)
    o = o @ p["out_w"].T + p["out_b"][0]

    def ln(z, w, b):
        mu = jnp.mean(z, -1, keepdims=True)
        var = jnp.mean((z - mu) ** 2, -1, keepdims=True)
        return (z - mu) * jax.lax.rsqrt(var + 1e-5) * w[0] + b[0]

    x1 = ln(x + o, p["ln1_w"], p["ln1_b"])
    f = jnp.maximum(x1 @ p["w1"].T + p["b1"][0], 0.0) @ p["w2"].T + p["b2"][0]
    x2 = ln(x1 + f, p["ln2_w"], p["ln2_b"])
    return jnp.transpose(x2, (1, 0, 2))


def init_params(key, E, Fdim):
    ks = jax.random.split(key, 8)
    sd = 0.05
    return {
        "in_w": sd * jax.random.normal(ks[0], (3 * E, E), jnp.float32),
        "in_b": sd * jax.random.normal(ks[1], (1, 3 * E), jnp.float32),
        "out_w": sd * jax.random.normal(ks[2], (E, E), jnp.float32),
        "out_b": sd * jax.random.normal(ks[3], (1, E), jnp.float32),
        "ln1_w": jnp.ones((1, E), jnp.float32),
        "ln1_b": jnp.zeros((1, E), jnp.float32),
        "w1": sd * jax.random.normal(ks[4], (Fdim, E), jnp.float32),
        "b1": sd * jax.random.normal(ks[5], (1, Fdim), jnp.float32),
        "w2": sd * jax.random.normal(ks[6], (E, Fdim), jnp.float32),
        "b2": sd * jax.random.normal(ks[7], (1, E), jnp.float32),
        "ln2_w": jnp.ones((1, E), jnp.float32),
        "ln2_b": jnp.zeros((1, E), jnp.float32),
    }


if __name__ == "__main__":
    S, B, E, H, FFN = 8, 2, 32, 4, 64
    key = jax.random.PRNGKey(0)
    kx, kp, kw = jax.random.split(key, 3)
    x = jax.random.normal(kx, (S, B, E), jnp.float32)
    pos = jax.random.normal(kp, (S, B, E), jnp.float32)
    params = init_params(kw, E, FFN)

    out = transformer_encoder_layer(x, pos, params, num_heads=H)
    out = jax.block_until_ready(out)

    ref = reference(x, pos, params, num_heads=H)
    assert out.shape == (S, B, E)
    # bf16 matmul operands (f32 accumulation) + approx reciprocal -> loose tol.
    max_diff = float(jnp.max(jnp.abs(out - ref)))
    assert jnp.allclose(out, ref, atol=2e-2, rtol=2e-2), (
        f"mismatch vs reference: max abs diff {max_diff}")
    print("KERNEL_OK")
</pallas_src>

<mosaic_0001>
module attributes {stable_mosaic.version = 11 : i64} {
  func.func @encoder_layer_kernel(%arg0: i32, %arg1: memref<1x8x32xf32, #tpu.memory_space<vmem>>, %arg2: memref<1x8x32xf32, #tpu.memory_space<vmem>>, %arg3: memref<32x64xbf16, #tpu.memory_space<vmem>>, %arg4: memref<1x64xf32, #tpu.memory_space<vmem>>, %arg5: memref<32x32xbf16, #tpu.memory_space<vmem>>, %arg6: memref<1x32xf32, #tpu.memory_space<vmem>>, %arg7: memref<32x32xbf16, #tpu.memory_space<vmem>>, %arg8: memref<1x32xf32, #tpu.memory_space<vmem>>, %arg9: memref<1x32xf32, #tpu.memory_space<vmem>>, %arg10: memref<1x32xf32, #tpu.memory_space<vmem>>, %arg11: memref<32x64xbf16, #tpu.memory_space<vmem>>, %arg12: memref<1x64xf32, #tpu.memory_space<vmem>>, %arg13: memref<64x32xbf16, #tpu.memory_space<vmem>>, %arg14: memref<1x32xf32, #tpu.memory_space<vmem>>, %arg15: memref<1x32xf32, #tpu.memory_space<vmem>>, %arg16: memref<1x32xf32, #tpu.memory_space<vmem>>, %arg17: memref<1x8x32xf32, #tpu.memory_space<vmem>>, %arg18: memref<4x8x8xbf16, #tpu.memory_space<vmem>>, %arg19: memref<4x8x8xbf16, #tpu.memory_space<vmem>>, %arg20: memref<4x8x8xbf16, #tpu.memory_space<vmem>>, %arg21: memref<4x8x8xbf16, #tpu.memory_space<vmem>>) attributes {dimension_semantics = [#tpu.dimension_semantics<parallel>], iteration_bounds = array<i64: 2>, scalar_prefetch = 0 : i64, scratch_operands = 4 : i64, tpu.core_type = #tpu.core_type<tc>, window_params = [{transform_indices = @transform_0, window_bounds = array<i64: 1, 8, 32>}, {transform_indices = @transform_1, window_bounds = array<i64: 1, 8, 32>}, {pipeline_mode = #tpu.pipeline_mode<synchronous>, transform_indices = @transform_2, window_bounds = array<i64: 32, 64>}, {pipeline_mode = #tpu.pipeline_mode<synchronous>, transform_indices = @transform_3, window_bounds = array<i64: 1, 64>}, {pipeline_mode = #tpu.pipeline_mode<synchronous>, transform_indices = @transform_4, window_bounds = array<i64: 32, 32>}, {pipeline_mode = #tpu.pipeline_mode<synchronous>, transform_indices = @transform_5, window_bounds = array<i64: 1, 32>}, {pipeline_mode = #tpu.pipeline_mode<synchronous>, transform_indices = @transform_6, window_bounds = array<i64: 32, 32>}, {pipeline_mode = #tpu.pipeline_mode<synchronous>, transform_indices = @transform_7, window_bounds = array<i64: 1, 32>}, {pipeline_mode = #tpu.pipeline_mode<synchronous>, transform_indices = @transform_8, window_bounds = array<i64: 1, 32>}, {pipeline_mode = #tpu.pipeline_mode<synchronous>, transform_indices = @transform_9, window_bounds = array<i64: 1, 32>}, {pipeline_mode = #tpu.pipeline_mode<synchronous>, transform_indices = @transform_10, window_bounds = array<i64: 32, 64>}, {pipeline_mode = #tpu.pipeline_mode<synchronous>, transform_indices = @transform_11, window_bounds = array<i64: 1, 64>}, {pipeline_mode = #tpu.pipeline_mode<synchronous>, transform_indices = @transform_12, window_bounds = array<i64: 64, 32>}, {pipeline_mode = #tpu.pipeline_mode<synchronous>, transform_indices = @transform_13, window_bounds = array<i64: 1, 32>}, {pipeline_mode = #tpu.pipeline_mode<synchronous>, transform_indices = @transform_14, window_bounds = array<i64: 1, 32>}, {pipeline_mode = #tpu.pipeline_mode<synchronous>, transform_indices = @transform_15, window_bounds = array<i64: 1, 32>}, {transform_indices = @transform_16, window_bounds = array<i64: 1, 8, 32>}]} {
    %c0 = arith.constant 0 : index
    %c0_0 = arith.constant 0 : index
    %c0_1 = arith.constant 0 : index
    %0 = vector.load %arg1[%c0, %c0_0, %c0_1] : memref<1x8x32xf32, #tpu.memory_space<vmem>>, vector<1x8x32xf32>
    %1 = vector.shape_cast %0 : vector<1x8x32xf32> to vector<8x32xf32>
    %c0_2 = arith.constant 0 : index
    %c0_3 = arith.constant 0 : index
    %c0_4 = arith.constant 0 : index
    %2 = vector.load %arg2[%c0_2, %c0_3, %c0_4] : memref<1x8x32xf32, #tpu.memory_space<vmem>>, vector<1x8x32xf32>
    %3 = vector.shape_cast %2 : vector<1x8x32xf32> to vector<8x32xf32>
    %4 = arith.addf %1, %3 : vector<8x32xf32>
    %5 = arith.truncf %4 : vector<8x32xf32> to vector<8x32xbf16>
    %6 = arith.truncf %1 : vector<8x32xf32> to vector<8x32xbf16>
    %c0_5 = arith.constant 0 : index
    %c0_6 = arith.constant 0 : index
    %7 = vector.load %arg3[%c0_5, %c0_6] : memref<32x64xbf16, #tpu.memory_space<vmem>>, vector<32x64xbf16>
    %cst = arith.constant dense<0.000000e+00> : vector<8x64xf32>
    %8 = tpu.matmul %5, %7, %cst {dimension_numbers = #tpu.dot_dimension_numbers<[1], [0], [0], [1], [0, 0, 1, 1], [], []>} : vector<8x32xbf16>, vector<32x64xbf16>, vector<8x64xf32> -> vector<8x64xf32>
    %c0_7 = arith.constant 0 : index
    %c0_8 = arith.constant 0 : index
    %9 = vector.load %arg4[%c0_7, %c0_8] : memref<1x64xf32, #tpu.memory_space<vmem>>, vector<1x64xf32>
    %10 = vector.shape_cast %9 : vector<1x64xf32> to vector<64xf32>
    %11 = vector.shape_cast %10 : vector<64xf32> to vector<1x64xf32>
    %12 = vector.broadcast %11 : vector<1x64xf32> to vector<8x64xf32>
    %13 = arith.addf %8, %12 : vector<8x64xf32>
    %c0_9 = arith.constant 0 : index
    %c0_10 = arith.constant 0 : index
    %14 = vector.load %arg5[%c0_9, %c0_10] : memref<32x32xbf16, #tpu.memory_space<vmem>>, vector<32x32xbf16>
    %cst_11 = arith.constant dense<0.000000e+00> : vector<8x32xf32>
    %15 = tpu.matmul %6, %14, %cst_11 {dimension_numbers = #tpu.dot_dimension_numbers<[1], [0], [0], [1], [0, 0, 1, 1], [], []>} : vector<8x32xbf16>, vector<32x32xbf16>, vector<8x32xf32> -> vector<8x32xf32>
    %c0_12 = arith.constant 0 : index
    %c0_13 = arith.constant 0 : index
    %16 = vector.load %arg6[%c0_12, %c0_13] : memref<1x32xf32, #tpu.memory_space<vmem>>, vector<1x32xf32>
    %17 = vector.shape_cast %16 : vector<1x32xf32> to vector<32xf32>
    %18 = vector.shape_cast %17 : vector<32xf32> to vector<1x32xf32>
    %19 = vector.broadcast %18 : vector<1x32xf32> to vector<8x32xf32>
    %20 = arith.addf %15, %19 : vector<8x32xf32>
    %21 = vector.extract_strided_slice %13 {offsets = [0, 0], sizes = [8, 8], strides = [1, 1]} : vector<8x64xf32> to vector<8x8xf32>
    %22 = arith.truncf %21 : vector<8x8xf32> to vector<8x8xbf16>
    %c0_14 = arith.constant 0 : index
    %c0_15 = arith.constant 0 : index
    %c0_16 = arith.constant 0 : index
    %23 = vector.load %arg18[%c0_14, %c0_15, %c0_16] : memref<4x8x8xbf16, #tpu.memory_space<vmem>>, vector<1x8x8xbf16>
    %24 = vector.shape_cast %23 : vector<1x8x8xbf16> to vector<8x8xbf16>
    %25 = vector.shape_cast %22 : vector<8x8xbf16> to vector<1x8x8xbf16>
    tpu.vector_store %arg18[%c0_14, %c0_15, %c0_16], %25 {strides = array<i32>} : memref<4x8x8xbf16, #tpu.memory_space<vmem>>, vector<1x8x8xbf16>,
    %26 = vector.extract_strided_slice %13 {offsets = [0, 32], sizes = [8, 8], strides = [1, 1]} : vector<8x64xf32> to vector<8x8xf32>
    %27 = arith.truncf %26 : vector<8x8xf32> to vector<8x8xbf16>
    %c0_17 = arith.constant 0 : index
    %c0_18 = arith.constant 0 : index
    %c0_19 = arith.constant 0 : index
    %28 = vector.load %arg19[%c0_17, %c0_18, %c0_19] : memref<4x8x8xbf16, #tpu.memory_space<vmem>>, vector<1x8x8xbf16>
    %29 = vector.shape_cast %28 : vector<1x8x8xbf16> to vector<8x8xbf16>
    %30 = vector.shape_cast %27 : vector<8x8xbf16> to vector<1x8x8xbf16>
    tpu.vector_store %arg19[%c0_17, %c0_18, %c0_19], %30 {strides = array<i32>} : memref<4x8x8xbf16, #tpu.memory_space<vmem>>, vector<1x8x8xbf16>,
    %31 = vector.extract_strided_slice %20 {offsets = [0, 0], sizes = [8, 8], strides = [1, 1]} : vector<8x32xf32> to vector<8x8xf32>
    %32 = arith.truncf %31 : vector<8x8xf32> to vector<8x8xbf16>
    %c0_20 = arith.constant 0 : index
    %c0_21 = arith.constant 0 : index
    %c0_22 = arith.constant 0 : index
    %33 = vector.load %arg20[%c0_20, %c0_21, %c0_22] : memref<4x8x8xbf16, #tpu.memory_space<vmem>>, vector<1x8x8xbf16>
    %34 = vector.shape_cast %33 : vector<1x8x8xbf16> to vector<8x8xbf16>
    %35 = vector.shape_cast %32 : vector<8x8xbf16> to vector<1x8x8xbf16>
    tpu.vector_store %arg20[%c0_20, %c0_21, %c0_22], %35 {strides = array<i32>} : memref<4x8x8xbf16, #tpu.memory_space<vmem>>, vector<1x8x8xbf16>,
    %36 = vector.extract_strided_slice %13 {offsets = [0, 8], sizes = [8, 8], strides = [1, 1]} : vector<8x64xf32> to vector<8x8xf32>
    %37 = arith.truncf %36 : vector<8x8xf32> to vector<8x8xbf16>
    %c1 = arith.constant 1 : index
    %c0_23 = arith.constant 0 : index
    %c0_24 = arith.constant 0 : index
    %38 = vector.load %arg18[%c1, %c0_23, %c0_24] : memref<4x8x8xbf16, #tpu.memory_space<vmem>>, vector<1x8x8xbf16>
    %39 = vector.shape_cast %38 : vector<1x8x8xbf16> to vector<8x8xbf16>
    %40 = vector.shape_cast %37 : vector<8x8xbf16> to vector<1x8x8xbf16>
    tpu.vector_store %arg18[%c1, %c0_23, %c0_24], %40 {strides = array<i32>} : memref<4x8x8xbf16, #tpu.memory_space<vmem>>, vector<1x8x8xbf16>,
    %41 = vector.extract_strided_slice %13 {offsets = [0, 40], sizes = [8, 8], strides = [1, 1]} : vector<8x64xf32> to vector<8x8xf32>
    %42 = arith.truncf %41 : vector<8x8xf32> to vector<8x8xbf16>
    %c1_25 = arith.constant 1 : index
    %c0_26 = arith.constant 0 : index
    %c0_27 = arith.constant 0 : index
    %43 = vector.load %arg19[%c1_25, %c0_26, %c0_27] : memref<4x8x8xbf16, #tpu.memory_space<vmem>>, vector<1x8x8xbf16>
    %44 = vector.shape_cast %43 : vector<1x8x8xbf16> to vector<8x8xbf16>
    %45 = vector.shape_cast %42 : vector<8x8xbf16> to vector<1x8x8xbf16>
    tpu.vector_store %arg19[%c1_25, %c0_26, %c0_27], %45 {strides = array<i32>} : memref<4x8x8xbf16, #tpu.memory_space<vmem>>, vector<1x8x8xbf16>,
    %46 = vector.extract_strided_slice %20 {offsets = [0, 8], sizes = [8, 8], strides = [1, 1]} : vector<8x32xf32> to vector<8x8xf32>
    %47 = arith.truncf %46 : vector<8x8xf32> to vector<8x8xbf16>
    %c1_28 = arith.constant 1 : index
    %c0_29 = arith.constant 0 : index
    %c0_30 = arith.constant 0 : index
    %48 = vector.load %arg20[%c1_28, %c0_29, %c0_30] : memref<4x8x8xbf16, #tpu.memory_space<vmem>>, vector<1x8x8xbf16>
    %49 = vector.shape_cast %48 : vector<1x8x8xbf16> to vector<8x8xbf16>
    %50 = vector.shape_cast %47 : vector<8x8xbf16> to vector<1x8x8xbf16>
    tpu.vector_store %arg20[%c1_28, %c0_29, %c0_30], %50 {strides = array<i32>} : memref<4x8x8xbf16, #tpu.memory_space<vmem>>, vector<1x8x8xbf16>,
    %51 = vector.extract_strided_slice %13 {offsets = [0, 16], sizes = [8, 8], strides = [1, 1]} : vector<8x64xf32> to vector<8x8xf32>
    %52 = arith.truncf %51 : vector<8x8xf32> to vector<8x8xbf16>
    %c2 = arith.constant 2 : index
    %c0_31 = arith.constant 0 : index
    %c0_32 = arith.constant 0 : index
    %53 = vector.load %arg18[%c2, %c0_31, %c0_32] : memref<4x8x8xbf16, #tpu.memory_space<vmem>>, vector<1x8x8xbf16>
    %54 = vector.shape_cast %53 : vector<1x8x8xbf16> to vector<8x8xbf16>
    %55 = vector.shape_cast %52 : vector<8x8xbf16> to vector<1x8x8xbf16>
    tpu.vector_store %arg18[%c2, %c0_31, %c0_32], %55 {strides = array<i32>} : memref<4x8x8xbf16, #tpu.memory_space<vmem>>, vector<1x8x8xbf16>,
    %56 = vector.extract_strided_slice %13 {offsets = [0, 48], sizes = [8, 8], strides = [1, 1]} : vector<8x64xf32> to vector<8x8xf32>
    %57 = arith.truncf %56 : vector<8x8xf32> to vector<8x8xbf16>
    %c2_33 = arith.constant 2 : index
    %c0_34 = arith.constant 0 : index
    %c0_35 = arith.constant 0 : index
    %58 = vector.load %arg19[%c2_33, %c0_34, %c0_35] : memref<4x8x8xbf16, #tpu.memory_space<vmem>>, vector<1x8x8xbf16>
    %59 = vector.shape_cast %58 : vector<1x8x8xbf16> to vector<8x8xbf16>
    %60 = vector.shape_cast %57 : vector<8x8xbf16> to vector<1x8x8xbf16>
    tpu.vector_store %arg19[%c2_33, %c0_34, %c0_35], %60 {strides = array<i32>} : memref<4x8x8xbf16, #tpu.memory_space<vmem>>, vector<1x8x8xbf16>,
    %61 = vector.extract_strided_slice %20 {offsets = [0, 16], sizes = [8, 8], strides = [1, 1]} : vector<8x32xf32> to vector<8x8xf32>
    %62 = arith.truncf %61 : vector<8x8xf32> to vector<8x8xbf16>
    %c2_36 = arith.constant 2 : index
    %c0_37 = arith.constant 0 : index
    %c0_38 = arith.constant 0 : index
    %63 = vector.load %arg20[%c2_36, %c0_37, %c0_38] : memref<4x8x8xbf16, #tpu.memory_space<vmem>>, vector<1x8x8xbf16>
    %64 = vector.shape_cast %63 : vector<1x8x8xbf16> to vector<8x8xbf16>
    %65 = vector.shape_cast %62 : vector<8x8xbf16> to vector<1x8x8xbf16>
    tpu.vector_store %arg20[%c2_36, %c0_37, %c0_38], %65 {strides = array<i32>} : memref<4x8x8xbf16, #tpu.memory_space<vmem>>, vector<1x8x8xbf16>,
    %66 = vector.extract_strided_slice %13 {offsets = [0, 24], sizes = [8, 8], strides = [1, 1]} : vector<8x64xf32> to vector<8x8xf32>
    %67 = arith.truncf %66 : vector<8x8xf32> to vector<8x8xbf16>
    %c3 = arith.constant 3 : index
    %c0_39 = arith.constant 0 : index
    %c0_40 = arith.constant 0 : index
    %68 = vector.load %arg18[%c3, %c0_39, %c0_40] : memref<4x8x8xbf16, #tpu.memory_space<vmem>>, vector<1x8x8xbf16>
    %69 = vector.shape_cast %68 : vector<1x8x8xbf16> to vector<8x8xbf16>
    %70 = vector.shape_cast %67 : vector<8x8xbf16> to vector<1x8x8xbf16>
    tpu.vector_store %arg18[%c3, %c0_39, %c0_40], %70 {strides = array<i32>} : memref<4x8x8xbf16, #tpu.memory_space<vmem>>, vector<1x8x8xbf16>,
    %71 = vector.extract_strided_slice %13 {offsets = [0, 56], sizes = [8, 8], strides = [1, 1]} : vector<8x64xf32> to vector<8x8xf32>
    %72 = arith.truncf %71 : vector<8x8xf32> to vector<8x8xbf16>
    %c3_41 = arith.constant 3 : index
    %c0_42 = arith.constant 0 : index
    %c0_43 = arith.constant 0 : index
    %73 = vector.load %arg19[%c3_41, %c0_42, %c0_43] : memref<4x8x8xbf16, #tpu.memory_space<vmem>>, vector<1x8x8xbf16>
    %74 = vector.shape_cast %73 : vector<1x8x8xbf16> to vector<8x8xbf16>
    %75 = vector.shape_cast %72 : vector<8x8xbf16> to vector<1x8x8xbf16>
    tpu.vector_store %arg19[%c3_41, %c0_42, %c0_43], %75 {strides = array<i32>} : memref<4x8x8xbf16, #tpu.memory_space<vmem>>, vector<1x8x8xbf16>,
    %76 = vector.extract_strided_slice %20 {offsets = [0, 24], sizes = [8, 8], strides = [1, 1]} : vector<8x32xf32> to vector<8x8xf32>
    %77 = arith.truncf %76 : vector<8x8xf32> to vector<8x8xbf16>
    %c3_44 = arith.constant 3 : index
    %c0_45 = arith.constant 0 : index
    %c0_46 = arith.constant 0 : index
    %78 = vector.load %arg20[%c3_44, %c0_45, %c0_46] : memref<4x8x8xbf16, #tpu.memory_space<vmem>>, vector<1x8x8xbf16>
    %79 = vector.shape_cast %78 : vector<1x8x8xbf16> to vector<8x8xbf16>
    %80 = vector.shape_cast %77 : vector<8x8xbf16> to vector<1x8x8xbf16>
    tpu.vector_store %arg20[%c3_44, %c0_45, %c0_46], %80 {strides = array<i32>} : memref<4x8x8xbf16, #tpu.memory_space<vmem>>, vector<1x8x8xbf16>,
    %c0_i32 = arith.constant 0 : i32
    %c4_i32 = arith.constant 4 : i32
    %81 = arith.addi %c0_i32, %c4_i32 : i32
    %c1_i32 = arith.constant 1 : i32
    scf.for %arg22 = %c0_i32 to %81 step %c1_i32  : i32 {
      %177 = arith.index_cast %arg22 : i32 to index
      %c0_97 = arith.constant 0 : index
      %c0_98 = arith.constant 0 : index
      %178 = vector.load %arg18[%177, %c0_97, %c0_98] : memref<4x8x8xbf16, #tpu.memory_space<vmem>>, vector<1x8x8xbf16>
      %179 = vector.shape_cast %178 : vector<1x8x8xbf16> to vector<8x8xbf16>
      %180 = arith.index_cast %arg22 : i32 to index
      %c0_99 = arith.constant 0 : index
      %c0_100 = arith.constant 0 : index
      %181 = vector.load %arg19[%180, %c0_99, %c0_100] : memref<4x8x8xbf16, #tpu.memory_space<vmem>>, vector<1x8x8xbf16>
      %182 = vector.shape_cast %181 : vector<1x8x8xbf16> to vector<8x8xbf16>
      %183 = arith.index_cast %arg22 : i32 to index
      %c0_101 = arith.constant 0 : index
      %c0_102 = arith.constant 0 : index
      %184 = vector.load %arg20[%183, %c0_101, %c0_102] : memref<4x8x8xbf16, #tpu.memory_space<vmem>>, vector<1x8x8xbf16>
      %185 = vector.shape_cast %184 : vector<1x8x8xbf16> to vector<8x8xbf16>
      %cst_103 = arith.constant dense<0.000000e+00> : vector<8x8xf32>
      %186 = tpu.matmul %179, %182, %cst_103 {dimension_numbers = #tpu.dot_dimension_numbers<[1], [1], [0], [0], [0, 0, 1, 0], [], []>} : vector<8x8xbf16>, vector<8x8xbf16>, vector<8x8xf32> -> vector<8x8xf32>
      %cst_104 = arith.constant dense<0xFF800000> : vector<8xf32>
      %187 = vector.multi_reduction <maximumf>, %186, %cst_104 [1] : vector<8x8xf32> to vector<8xf32>
      %188 = vector.shape_cast %187 : vector<8xf32> to vector<8x1xf32>
      %189 = vector.broadcast %188 : vector<8x1xf32> to vector<8x8xf32>
      %190 = arith.subf %186, %189 : vector<8x8xf32>
      %191 = math.exp %190 : vector<8x8xf32>
      %cst_105 = arith.constant dense<0.000000e+00> : vector<8xf32>
      %192 = vector.multi_reduction <add>, %191, %cst_105 [1] : vector<8x8xf32> to vector<8xf32>
      %193 = vector.shape_cast %192 : vector<8xf32> to vector<8x1xf32>
      %194 = arith.truncf %191 : vector<8x8xf32> to vector<8x8xbf16>
      %cst_106 = arith.constant dense<0.000000e+00> : vector<8x8xf32>
      %195 = tpu.matmul %194, %185, %cst_106 {dimension_numbers = #tpu.dot_dimension_numbers<[1], [0], [0], [1], [0, 0, 1, 1], [], []>} : vector<8x8xbf16>, vector<8x8xbf16>, vector<8x8xf32> -> vector<8x8xf32>
      %196 = tpu.reciprocal %193 {approx = true} : vector<8x1xf32> -> vector<8x1xf32>
      %197 = vector.broadcast %196 : vector<8x1xf32> to vector<8x8xf32>
      %198 = arith.mulf %195, %197 : vector<8x8xf32>
      %199 = arith.truncf %198 : vector<8x8xf32> to vector<8x8xbf16>
      %200 = arith.index_cast %arg22 : i32 to index
      %c0_107 = arith.constant 0 : index
      %c0_108 = arith.constant 0 : index
      %201 = vector.load %arg21[%200, %c0_107, %c0_108] : memref<4x8x8xbf16, #tpu.memory_space<vmem>>, vector<1x8x8xbf16>
      %202 = vector.shape_cast %201 : vector<1x8x8xbf16> to vector<8x8xbf16>
      %203 = vector.shape_cast %199 : vector<8x8xbf16> to vector<1x8x8xbf16>
      tpu.vector_store %arg21[%200, %c0_107, %c0_108], %203 {strides = array<i32>} : memref<4x8x8xbf16, #tpu.memory_space<vmem>>, vector<1x8x8xbf16>,
    }
    %c4_i32_47 = arith.constant 4 : i32
    %c0_48 = arith.constant 0 : index
    %c0_49 = arith.constant 0 : index
    %c0_50 = arith.constant 0 : index
    %82 = vector.load %arg21[%c0_48, %c0_49, %c0_50] : memref<4x8x8xbf16, #tpu.memory_space<vmem>>, vector<1x8x8xbf16>
    %83 = vector.shape_cast %82 : vector<1x8x8xbf16> to vector<8x8xbf16>
    %c1_51 = arith.constant 1 : index
    %c0_52 = arith.constant 0 : index
    %c0_53 = arith.constant 0 : index
    %84 = vector.load %arg21[%c1_51, %c0_52, %c0_53] : memref<4x8x8xbf16, #tpu.memory_space<vmem>>, vector<1x8x8xbf16>
    %85 = vector.shape_cast %84 : vector<1x8x8xbf16> to vector<8x8xbf16>
    %c2_54 = arith.constant 2 : index
    %c0_55 = arith.constant 0 : index
    %c0_56 = arith.constant 0 : index
    %86 = vector.load %arg21[%c2_54, %c0_55, %c0_56] : memref<4x8x8xbf16, #tpu.memory_space<vmem>>, vector<1x8x8xbf16>
    %87 = vector.shape_cast %86 : vector<1x8x8xbf16> to vector<8x8xbf16>
    %c3_57 = arith.constant 3 : index
    %c0_58 = arith.constant 0 : index
    %c0_59 = arith.constant 0 : index
    %88 = vector.load %arg21[%c3_57, %c0_58, %c0_59] : memref<4x8x8xbf16, #tpu.memory_space<vmem>>, vector<1x8x8xbf16>
    %89 = vector.shape_cast %88 : vector<1x8x8xbf16> to vector<8x8xbf16>
    %90 = tpu.concatenate %83, %85, %87, %89 in 1 : vector<8x8xbf16>, vector<8x8xbf16>, vector<8x8xbf16>, vector<8x8xbf16> -> vector<8x32xbf16>
    %c0_60 = arith.constant 0 : index
    %c0_61 = arith.constant 0 : index
    %91 = vector.load %arg7[%c0_60, %c0_61] : memref<32x32xbf16, #tpu.memory_space<vmem>>, vector<32x32xbf16>
    %cst_62 = arith.constant dense<0.000000e+00> : vector<8x32xf32>
    %92 = tpu.matmul %90, %91, %cst_62 {dimension_numbers = #tpu.dot_dimension_numbers<[1], [0], [0], [1], [0, 0, 1, 1], [], []>} : vector<8x32xbf16>, vector<32x32xbf16>, vector<8x32xf32> -> vector<8x32xf32>
    %c0_63 = arith.constant 0 : index
    %c0_64 = arith.constant 0 : index
    %93 = vector.load %arg8[%c0_63, %c0_64] : memref<1x32xf32, #tpu.memory_space<vmem>>, vector<1x32xf32>
    %94 = vector.shape_cast %93 : vector<1x32xf32> to vector<32xf32>
    %95 = vector.shape_cast %94 : vector<32xf32> to vector<1x32xf32>
    %96 = vector.broadcast %95 : vector<1x32xf32> to vector<8x32xf32>
    %97 = arith.addf %92, %96 : vector<8x32xf32>
    %98 = arith.addf %1, %97 : vector<8x32xf32>
    %c0_65 = arith.constant 0 : index
    %c0_66 = arith.constant 0 : index
    %99 = vector.load %arg9[%c0_65, %c0_66] : memref<1x32xf32, #tpu.memory_space<vmem>>, vector<1x32xf32>
    %100 = vector.shape_cast %99 : vector<1x32xf32> to vector<32xf32>
    %c0_67 = arith.constant 0 : index
    %c0_68 = arith.constant 0 : index
    %101 = vector.load %arg10[%c0_67, %c0_68] : memref<1x32xf32, #tpu.memory_space<vmem>>, vector<1x32xf32>
    %102 = vector.shape_cast %101 : vector<1x32xf32> to vector<32xf32>
    %cst_69 = arith.constant dense<0.000000e+00> : vector<8xf32>
    %103 = vector.multi_reduction <add>, %98, %cst_69 [1] : vector<8x32xf32> to vector<8xf32>
    %104 = vector.shape_cast %103 : vector<8xf32> to vector<8x1xf32>
    %cst_70 = arith.constant 3.200000e+01 : f32
    %105 = vector.broadcast %cst_70 : f32 to vector<8x1xf32>
    %106 = arith.divf %104, %105 : vector<8x1xf32>
    %107 = vector.broadcast %106 : vector<8x1xf32> to vector<8x32xf32>
    %108 = arith.subf %98, %107 : vector<8x32xf32>
    %109 = arith.mulf %108, %108 : vector<8x32xf32>
    %cst_71 = arith.constant dense<0.000000e+00> : vector<8xf32>
    %110 = vector.multi_reduction <add>, %109, %cst_71 [1] : vector<8x32xf32> to vector<8xf32>
    %111 = vector.shape_cast %110 : vector<8xf32> to vector<8x1xf32>
    %cst_72 = arith.constant 3.200000e+01 : f32
    %112 = vector.broadcast %cst_72 : f32 to vector<8x1xf32>
    %113 = arith.divf %111, %112 : vector<8x1xf32>
    %114 = vector.broadcast %106 : vector<8x1xf32> to vector<8x32xf32>
    %115 = arith.subf %98, %114 : vector<8x32xf32>
    %cst_73 = arith.constant 9.99999974E-6 : f32
    %116 = vector.broadcast %cst_73 : f32 to vector<8x1xf32>
    %117 = arith.addf %113, %116 : vector<8x1xf32>
    %118 = math.rsqrt %117 : vector<8x1xf32>
    %119 = vector.broadcast %118 : vector<8x1xf32> to vector<8x32xf32>
    %120 = arith.mulf %115, %119 : vector<8x32xf32>
    %121 = vector.shape_cast %100 : vector<32xf32> to vector<1x32xf32>
    %122 = vector.broadcast %121 : vector<1x32xf32> to vector<8x32xf32>
    %123 = arith.mulf %120, %122 : vector<8x32xf32>
    %124 = vector.shape_cast %102 : vector<32xf32> to vector<1x32xf32>
    %125 = vector.broadcast %124 : vector<1x32xf32> to vector<8x32xf32>
    %126 = arith.addf %123, %125 : vector<8x32xf32>
    %127 = arith.truncf %126 : vector<8x32xf32> to vector<8x32xbf16>
    %c0_74 = arith.constant 0 : index
    %c0_75 = arith.constant 0 : index
    %128 = vector.load %arg11[%c0_74, %c0_75] : memref<32x64xbf16, #tpu.memory_space<vmem>>, vector<32x64xbf16>
    %cst_76 = arith.constant dense<0.000000e+00> : vector<8x64xf32>
    %129 = tpu.matmul %127, %128, %cst_76 {dimension_numbers = #tpu.dot_dimension_numbers<[1], [0], [0], [1], [0, 0, 1, 1], [], []>} : vector<8x32xbf16>, vector<32x64xbf16>, vector<8x64xf32> -> vector<8x64xf32>
    %c0_77 = arith.constant 0 : index
    %c0_78 = arith.constant 0 : index
    %130 = vector.load %arg12[%c0_77, %c0_78] : memref<1x64xf32, #tpu.memory_space<vmem>>, vector<1x64xf32>
    %131 = vector.shape_cast %130 : vector<1x64xf32> to vector<64xf32>
    %132 = vector.shape_cast %131 : vector<64xf32> to vector<1x64xf32>
    %133 = vector.broadcast %132 : vector<1x64xf32> to vector<8x64xf32>
    %134 = arith.addf %129, %133 : vector<8x64xf32>
    %cst_79 = arith.constant 0.000000e+00 : f32
    %135 = vector.broadcast %cst_79 : f32 to vector<8x64xf32>
    %136 = arith.maximumf %134, %135 : vector<8x64xf32>
    %137 = arith.truncf %136 : vector<8x64xf32> to vector<8x64xbf16>
    %c0_80 = arith.constant 0 : index
    %c0_81 = arith.constant 0 : index
    %138 = vector.load %arg13[%c0_80, %c0_81] : memref<64x32xbf16, #tpu.memory_space<vmem>>, vector<64x32xbf16>
    %cst_82 = arith.constant dense<0.000000e+00> : vector<8x32xf32>
    %139 = tpu.matmul %137, %138, %cst_82 {dimension_numbers = #tpu.dot_dimension_numbers<[1], [0], [0], [1], [0, 0, 1, 1], [], []>} : vector<8x64xbf16>, vector<64x32xbf16>, vector<8x32xf32> -> vector<8x32xf32>
    %c0_83 = arith.constant 0 : index
    %c0_84 = arith.constant 0 : index
    %140 = vector.load %arg14[%c0_83, %c0_84] : memref<1x32xf32, #tpu.memory_space<vmem>>, vector<1x32xf32>
    %141 = vector.shape_cast %140 : vector<1x32xf32> to vector<32xf32>
    %142 = vector.shape_cast %141 : vector<32xf32> to vector<1x32xf32>
    %143 = vector.broadcast %142 : vector<1x32xf32> to vector<8x32xf32>
    %144 = arith.addf %139, %143 : vector<8x32xf32>
    %145 = arith.addf %126, %144 : vector<8x32xf32>
    %c0_85 = arith.constant 0 : index
    %c0_86 = arith.constant 0 : index
    %146 = vector.load %arg15[%c0_85, %c0_86] : memref<1x32xf32, #tpu.memory_space<vmem>>, vector<1x32xf32>
    %147 = vector.shape_cast %146 : vector<1x32xf32> to vector<32xf32>
    %c0_87 = arith.constant 0 : index
    %c0_88 = arith.constant 0 : index
    %148 = vector.load %arg16[%c0_87, %c0_88] : memref<1x32xf32, #tpu.memory_space<vmem>>, vector<1x32xf32>
    %149 = vector.shape_cast %148 : vector<1x32xf32> to vector<32xf32>
    %cst_89 = arith.constant dense<0.000000e+00> : vector<8xf32>
    %150 = vector.multi_reduction <add>, %145, %cst_89 [1] : vector<8x32xf32> to vector<8xf32>
    %151 = vector.shape_cast %150 : vector<8xf32> to vector<8x1xf32>
    %cst_90 = arith.constant 3.200000e+01 : f32
    %152 = vector.broadcast %cst_90 : f32 to vector<8x1xf32>
    %153 = arith.divf %151, %152 : vector<8x1xf32>
    %154 = vector.broadcast %153 : vector<8x1xf32> to vector<8x32xf32>
    %155 = arith.subf %145, %154 : vector<8x32xf32>
    %156 = arith.mulf %155, %155 : vector<8x32xf32>
    %cst_91 = arith.constant dense<0.000000e+00> : vector<8xf32>
    %157 = vector.multi_reduction <add>, %156, %cst_91 [1] : vector<8x32xf32> to vector<8xf32>
    %158 = vector.shape_cast %157 : vector<8xf32> to vector<8x1xf32>
    %cst_92 = arith.constant 3.200000e+01 : f32
    %159 = vector.broadcast %cst_92 : f32 to vector<8x1xf32>
    %160 = arith.divf %158, %159 : vector<8x1xf32>
    %161 = vector.broadcast %153 : vector<8x1xf32> to vector<8x32xf32>
    %162 = arith.subf %145, %161 : vector<8x32xf32>
    %cst_93 = arith.constant 9.99999974E-6 : f32
    %163 = vector.broadcast %cst_93 : f32 to vector<8x1xf32>
    %164 = arith.addf %160, %163 : vector<8x1xf32>
    %165 = math.rsqrt %164 : vector<8x1xf32>
    %166 = vector.broadcast %165 : vector<8x1xf32> to vector<8x32xf32>
    %167 = arith.mulf %162, %166 : vector<8x32xf32>
    %168 = vector.shape_cast %147 : vector<32xf32> to vector<1x32xf32>
    %169 = vector.broadcast %168 : vector<1x32xf32> to vector<8x32xf32>
    %170 = arith.mulf %167, %169 : vector<8x32xf32>
    %171 = vector.shape_cast %149 : vector<32xf32> to vector<1x32xf32>
    %172 = vector.broadcast %171 : vector<1x32xf32> to vector<8x32xf32>
    %173 = arith.addf %170, %172 : vector<8x32xf32>
    %c0_94 = arith.constant 0 : index
    %c0_95 = arith.constant 0 : index
    %c0_96 = arith.constant 0 : index
    %174 = vector.load %arg17[%c0_94, %c0_95, %c0_96] : memref<1x8x32xf32, #tpu.memory_space<vmem>>, vector<1x8x32xf32>
    %175 = vector.shape_cast %174 : vector<1x8x32xf32> to vector<8x32xf32>
    %176 = vector.shape_cast %173 : vector<8x32xf32> to vector<1x8x32xf32>
    tpu.vector_store %arg17[%c0_94, %c0_95, %c0_96], %176 {strides = array<i32>} : memref<1x8x32xf32, #tpu.memory_space<vmem>>, vector<1x8x32xf32>,
    return
  }
  func.func @transform_0(%arg0: i32) -> (i32, i32, i32) {
    %c0_i32 = arith.constant 0 : i32
    %c0_i32_0 = arith.constant 0 : i32
    %c0_i32_1 = arith.constant 0 : i32
    return %arg0, %c0_i32, %c0_i32_0 : i32, i32, i32
  }
  func.func @transform_1(%arg0: i32) -> (i32, i32, i32) {
    %c0_i32 = arith.constant 0 : i32
    %c0_i32_0 = arith.constant 0 : i32
    %c0_i32_1 = arith.constant 0 : i32
    return %arg0, %c0_i32, %c0_i32_0 : i32, i32, i32
  }
  func.func @transform_2(%arg0: i32) -> (i32, i32) {
    %c0_i32 = arith.constant 0 : i32
    %c0_i32_0 = arith.constant 0 : i32
    %c0_i32_1 = arith.constant 0 : i32
    return %c0_i32, %c0_i32_0 : i32, i32
  }
  func.func @transform_3(%arg0: i32) -> (i32, i32) {
    %c0_i32 = arith.constant 0 : i32
    %c0_i32_0 = arith.constant 0 : i32
    %c0_i32_1 = arith.constant 0 : i32
    return %c0_i32, %c0_i32_0 : i32, i32
  }
  func.func @transform_4(%arg0: i32) -> (i32, i32) {
    %c0_i32 = arith.constant 0 : i32
    %c0_i32_0 = arith.constant 0 : i32
    %c0_i32_1 = arith.constant 0 : i32
    return %c0_i32, %c0_i32_0 : i32, i32
  }
  func.func @transform_5(%arg0: i32) -> (i32, i32) {
    %c0_i32 = arith.constant 0 : i32
    %c0_i32_0 = arith.constant 0 : i32
    %c0_i32_1 = arith.constant 0 : i32
    return %c0_i32, %c0_i32_0 : i32, i32
  }
  func.func @transform_6(%arg0: i32) -> (i32, i32) {
    %c0_i32 = arith.constant 0 : i32
    %c0_i32_0 = arith.constant 0 : i32
    %c0_i32_1 = arith.constant 0 : i32
    return %c0_i32, %c0_i32_0 : i32, i32
  }
  func.func @transform_7(%arg0: i32) -> (i32, i32) {
    %c0_i32 = arith.constant 0 : i32
    %c0_i32_0 = arith.constant 0 : i32
    %c0_i32_1 = arith.constant 0 : i32
    return %c0_i32, %c0_i32_0 : i32, i32
  }
  func.func @transform_8(%arg0: i32) -> (i32, i32) {
    %c0_i32 = arith.constant 0 : i32
    %c0_i32_0 = arith.constant 0 : i32
    %c0_i32_1 = arith.constant 0 : i32
    return %c0_i32, %c0_i32_0 : i32, i32
  }
  func.func @transform_9(%arg0: i32) -> (i32, i32) {
    %c0_i32 = arith.constant 0 : i32
    %c0_i32_0 = arith.constant 0 : i32
    %c0_i32_1 = arith.constant 0 : i32
    return %c0_i32, %c0_i32_0 : i32, i32
  }
  func.func @transform_10(%arg0: i32) -> (i32, i32) {
    %c0_i32 = arith.constant 0 : i32
    %c0_i32_0 = arith.constant 0 : i32
    %c0_i32_1 = arith.constant 0 : i32
    return %c0_i32, %c0_i32_0 : i32, i32
  }
  func.func @transform_11(%arg0: i32) -> (i32, i32) {
    %c0_i32 = arith.constant 0 : i32
    %c0_i32_0 = arith.constant 0 : i32
    %c0_i32_1 = arith.constant 0 : i32
    return %c0_i32, %c0_i32_0 : i32, i32
  }
  func.func @transform_12(%arg0: i32) -> (i32, i32) {
    %c0_i32 = arith.constant 0 : i32
    %c0_i32_0 = arith.constant 0 : i32
    %c0_i32_1 = arith.constant 0 : i32
    return %c0_i32, %c0_i32_0 : i32, i32
  }
  func.func @transform_13(%arg0: i32) -> (i32, i32) {
    %c0_i32 = arith.constant 0 : i32
    %c0_i32_0 = arith.constant 0 : i32
    %c0_i32_1 = arith.constant 0 : i32
    return %c0_i32, %c0_i32_0 : i32, i32
  }
  func.func @transform_14(%arg0: i32) -> (i32, i32) {
    %c0_i32 = arith.constant 0 : i32
    %c0_i32_0 = arith.constant 0 : i32
    %c0_i32_1 = arith.constant 0 : i32
    return %c0_i32, %c0_i32_0 : i32, i32
  }
  func.func @transform_15(%arg0: i32) -> (i32, i32) {
    %c0_i32 = arith.constant 0 : i32
    %c0_i32_0 = arith.constant 0 : i32
    %c0_i32_1 = arith.constant 0 : i32
    return %c0_i32, %c0_i32_0 : i32, i32
  }
  func.func @transform_16(%arg0: i32) -> (i32, i32, i32) {
    %c0_i32 = arith.constant 0 : i32
    %c0_i32_0 = arith.constant 0 : i32
    %c0_i32_1 = arith.constant 0 : i32
    return %arg0, %c0_i32, %c0_i32_0 : i32, i32, i32
  }
}

</mosaic_0001>

<llo_original>
// kernel: tpu_custom_call.1
$region0: #{tpu_custom_call.1}
  #allocation0 [shape = 'u32[]', space=smem, size = 0x4, offset = 0x4, fixed_abs, tag = 'smem constant byte address 0x4 - core index']
  #allocation1 [shape = 'u32[144,128]{1,0:T(1,128)}', space=vmem, size = 0x12000, scoped, tag = 'internal scratch']
  #allocation2 [shape = 'bf16[4,8,8]{2,1,0:T(8,128)(2,1)}', space=vmem, size = 0x2000, scoped, tag = 'scratch operand']
  #allocation3 [shape = 'bf16[4,8,8]{2,1,0:T(8,128)(2,1)}', space=vmem, size = 0x2000, scoped, tag = 'scratch operand']
  #allocation4 [shape = 'bf16[4,8,8]{2,1,0:T(8,128)(2,1)}', space=vmem, size = 0x2000, scoped, tag = 'scratch operand']
  #allocation5 [shape = 'bf16[4,8,8]{2,1,0:T(8,128)(2,1)}', space=vmem, size = 0x2000, scoped, tag = 'scratch operand']
  %s0 = inlined_call_operand.vmem [shape: f32[2,8,32], index: 0, kind: input, shape index: {}]
  %s1 = inlined_call_operand.vmem [shape: f32[2,8,32], index: 1, kind: input, shape index: {}]
  %s2 = inlined_call_operand.vmem [shape: bf16[32,64], index: 2, kind: input, shape index: {}]
  %s3 = inlined_call_operand.hbm [shape: f32[1,64], index: 3, kind: input, shape index: {}]
  %s4 = inlined_call_operand.hbm [shape: bf16[32,32], index: 4, kind: input, shape index: {}]
  %s5 = inlined_call_operand.hbm [shape: f32[1,32], index: 5, kind: input, shape index: {}]
  %s6 = inlined_call_operand.hbm [shape: bf16[32,32], index: 6, kind: input, shape index: {}]
  %s7 = inlined_call_operand.hbm [shape: f32[1,32], index: 7, kind: input, shape index: {}]
  %s8 = inlined_call_operand.hbm [shape: f32[1,32], index: 8, kind: input, shape index: {}]
  %s9 = inlined_call_operand.hbm [shape: f32[1,32], index: 9, kind: input, shape index: {}]
  %s10 = inlined_call_operand.vmem [shape: bf16[32,64], index: 10, kind: input, shape index: {}]
  %s11 = inlined_call_operand.vmem [shape: f32[1,64], index: 11, kind: input, shape index: {}]
  %s12 = inlined_call_operand.vmem [shape: bf16[64,32], index: 12, kind: input, shape index: {}]
  %s13 = inlined_call_operand.vmem [shape: f32[1,32], index: 13, kind: input, shape index: {}]
  %s14 = inlined_call_operand.vmem [shape: f32[1,32], index: 14, kind: input, shape index: {}]
  %s15 = inlined_call_operand.vmem [shape: f32[1,32], index: 15, kind: input, shape index: {}]
  %s16 = inlined_call_operand.hbm [shape: f32[2,8,32], index: 16, kind: output, shape index: {}]
  %s17 = sld [smem:[#allocation0]]
  $region132: #{tpu_custom_call.1} parent=0
    _
  %s19 = ssub.s32 1, %s17
  %s20 = scalar_select 0, %s19, %s17
  $region1: #{tpu_custom_call.1} parent=0
    #allocation6 [shape = 'u8[512]{0}', space=vmem, size = 0x400, scoped, tag = 'input window, operand 3, single buffered']
    #allocation7 [shape = 's32[2]{0}', space=sflag, size = 0x8, scoped, tag = 'scoped memory for tpu_custom_call.1']
    #allocation8 [shape = 's32[2]{0}', space=sflag, size = 0x8, scoped, tag = 'scoped memory for tpu_custom_call.1']
    #allocation9 [shape = 'u8[8192]{0}', space=vmem, size = 0x2000, scoped, tag = 'input window, operand 4, single buffered']
    #allocation10 [shape = 's32[1]{0}', space=sflag, size = 0x4, scoped, tag = 'scoped memory for tpu_custom_call.1']
    #allocation11 [shape = 'u8[512]{0}', space=vmem, size = 0x400, scoped, tag = 'input window, operand 5, single buffered']
    #allocation12 [shape = 'u8[8192]{0}', space=vmem, size = 0x2000, scoped, tag = 'input window, operand 6, single buffered']
    #allocation13 [shape = 's32[1]{0}', space=sflag, size = 0x4, scoped, tag = 'scoped memory for tpu_custom_call.1']
    #allocation14 [shape = 'u8[512]{0}', space=vmem, size = 0x400, scoped, tag = 'input window, operand 7, single buffered']
    #allocation15 [shape = 'u8[512]{0}', space=vmem, size = 0x400, scoped, tag = 'input window, operand 8, single buffered']
    #allocation16 [shape = 's32[1]{0}', space=sflag, size = 0x4, scoped, tag = 'scoped memory for tpu_custom_call.1']
    #allocation17 [shape = 'u8[512]{0}', space=vmem, size = 0x400, scoped, tag = 'input window, operand 9, single buffered']
    #allocation18 [shape = 'u8[8192]{0}', space=vmem, size = 0x2000, scoped, tag = 'output window, operand 0']
    %21 = vsyncpa [#allocation7], 0
    %22 = vsyncpa [#allocation10], 0
    %23 = vsyncpa [#allocation13], 0
    %24 = vsyncpa [#allocation16], 0
    %25 = vsyncpa [#allocation8], 0
    %s26 = scalar_lea.sflag [#allocation8], 1
    %27 = vsyncpa %s26, 0
    loop: start=0, step=1, limit=4
    $region2: #{tpu_custom_call.1} parent=1 // loop_pre_header
      _
    $region3: #{tpu_custom_call.1} parent=1 // loop_header
      %s29 = sphi 0, %s33
      %p30 = scmp.ge.s32.totalorder %s29, 4
      %s39 = sphi 0, %s41
      %s42 = sphi 0, %s39
      %s43 = sphi 0, %s42
      %s59 = sphi 0, %s43
      %s65 = sphi 0, %s67
      %s68 = sphi 0, %s65
      %s69 = sphi 0, %s68
      %s85 = sphi 0, %s69
      %s89 = sphi 0, %s89
      %s91 = sphi 0, %s89
      %s92 = sphi 0, %s91
      %s106 = sphi 0, %s92
      %s110 = sphi 0, %s110
      %s112 = sphi 0, %s110
      %s113 = sphi 0, %s112
      %s127 = sphi 0, %s113
      %s131 = sphi 0, %s131
      %s133 = sphi 0, %s131
      %s134 = sphi 0, %s133
      %s148 = sphi 0, %s134
      %s152 = sphi 0, %s152
      %s154 = sphi 0, %s152
      %s155 = sphi 0, %s154
      %s169 = sphi 0, %s155
      %s173 = sphi 0, %s173
      %s175 = sphi 0, %s173
      %s176 = sphi 0, %s175
      %s190 = sphi 0, %s176
      %s194 = sphi 0, %s194
      %s196 = sphi 0, %s194
      %s197 = sphi 0, %s196
      %s211 = sphi 0, %s197
      %s215 = sphi 0, %s215
      %s217 = sphi 0, %s215
      %s218 = sphi 0, %s217
      %s232 = sphi 0, %s218
      %s236 = sphi 0, %s236
      %s238 = sphi 0, %s236
      %s239 = sphi 0, %s238
      %s253 = sphi 0, %s239
      %s257 = sphi 0, %s257
      %s259 = sphi 0, %s257
      %s260 = sphi 0, %s259
      %s274 = sphi 0, %s260
      %s278 = sphi 0, %s278
      %s280 = sphi 0, %s278
      %s281 = sphi 0, %s280
      %s295 = sphi 0, %s281
      %s299 = sphi 0, %s299
      %s301 = sphi 0, %s299
      %s302 = sphi 0, %s301
      %s316 = sphi 0, %s302
      %s320 = sphi 0, %s320
      %s322 = sphi 0, %s320
      %s323 = sphi 0, %s322
      %s337 = sphi 0, %s323
      %s341 = sphi 0, %s341
      %s343 = sphi 0, %s341
      %s344 = sphi 0, %s343
      %s358 = sphi 0, %s344
      %s362 = sphi 0, %s362
      %s364 = sphi 0, %s362
      %s365 = sphi 0, %s364
      %s379 = sphi 0, %s365
      %s385 = sphi 0, %s387
      %s388 = sphi 0, %s385
      %s389 = sphi 0, %s388
      %s405 = sphi 0, %s389
    $region4: #{tpu_custom_call.1} parent=1 // loop_header_branch
      %32 = sbr.rel (%p30) target = $region8
    $region5: #{tpu_custom_call.1} parent=1 // loop_body
      %s34 = ssub.s32 %s29, 1
      %s35 = ssub.s32 %s29, 2
      %s36 = sadd.s32 %s29, 1
      %s37 = ssub.s32 %s29, %s36
      %p38 = scmp.eq.s32.totalorder %s37, 0
      %s40 = sadd.s32 %s39, 1
      %s41 = scalar_select %p38, %s39, %s40
      %p44 = pneg %p38
      %p45 = scmp.eq.s32.totalorder %s29, 1
      %p46 = por %p44, %p45
      %p47 = scmp.ne.s32.totalorder %s39, %s42
      %p48 = scmp.eq.s32.totalorder %s29, 0
      %p49 = por %p47, %p48
      %p50 = scmp.ne.s32.totalorder %s39, %s42
      %p51 = scmp.eq.s32.totalorder %s34, 1
      %p52 = por %p50, %p51
      %p53 = scmp.ne.s32.totalorder %s42, %s43
      %p54 = scmp.eq.s32.totalorder %s34, 0
      %p55 = por %p53, %p54
      %p56 = scmp.ne.s32.totalorder %s42, %s43
      %p57 = scmp.eq.s32.totalorder %s35, 1
      %p58 = por %p56, %p57
      %p60 = scmp.ne.s32.totalorder %s43, %s59
      %p61 = scmp.eq.s32.totalorder %s35, 0
      %p62 = por %p60, %p61
      %s63 = ssub.s32 %s29, %s36
      %p64 = scmp.eq.s32.totalorder %s63, 0
      %s66 = sadd.s32 %s65, 1
      %s67 = scalar_select %p64, %s65, %s66
      %p70 = pneg %p64
      %p71 = scmp.eq.s32.totalorder %s29, 1
      %p72 = por %p70, %p71
      %p73 = scmp.ne.s32.totalorder %s65, %s68
      %p74 = scmp.eq.s32.totalorder %s29, 0
      %p75 = por %p73, %p74
      %p76 = scmp.ne.s32.totalorder %s65, %s68
      %p77 = scmp.eq.s32.totalorder %s34, 1
      %p78 = por %p76, %p77
      %p79 = scmp.ne.s32.totalorder %s68, %s69
      %p80 = scmp.eq.s32.totalorder %s34, 0
      %p81 = por %p79, %p80
      %p82 = scmp.ne.s32.totalorder %s68, %s69
      %p83 = scmp.eq.s32.totalorder %s35, 1
      %p84 = por %p82, %p83
      %p86 = scmp.ne.s32.totalorder %s69, %s85
      %p87 = scmp.eq.s32.totalorder %s35, 0
      %p88 = por %p86, %p87
      %s90 = sadd.s32 %s89, 1
      %p93 = scmp.eq.s32.totalorder %s29, 1
      %p94 = scmp.ne.s32.totalorder %s89, %s91
      %p95 = scmp.eq.s32.totalorder %s29, 0
      %p96 = por %p94, %p95
      %p97 = scmp.ne.s32.totalorder %s89, %s91
      %p98 = scmp.eq.s32.totalorder %s34, 1
      %p99 = por %p97, %p98
      %p100 = scmp.ne.s32.totalorder %s91, %s92
      %p101 = scmp.eq.s32.totalorder %s34, 0
      %p102 = por %p100, %p101
      %p103 = scmp.ne.s32.totalorder %s91, %s92
      %p104 = scmp.eq.s32.totalorder %s35, 1
      %p105 = por %p103, %p104
      %p107 = scmp.ne.s32.totalorder %s92, %s106
      %p108 = scmp.eq.s32.totalorder %s35, 0
      %p109 = por %p107, %p108
      %s111 = sadd.s32 %s110, 1
      %p114 = scmp.eq.s32.totalorder %s29, 1
      %p115 = scmp.ne.s32.totalorder %s110, %s112
      %p116 = scmp.eq.s32.totalorder %s29, 0
      %p117 = por %p115, %p116
      %p118 = scmp.ne.s32.totalorder %s110, %s112
      %p119 = scmp.eq.s32.totalorder %s34, 1
      %p120 = por %p118, %p119
      %p121 = scmp.ne.s32.totalorder %s112, %s113
      %p122 = scmp.eq.s32.totalorder %s34, 0
      %p123 = por %p121, %p122
      %p124 = scmp.ne.s32.totalorder %s112, %s113
      %p125 = scmp.eq.s32.totalorder %s35, 1
      %p126 = por %p124, %p125
      %p128 = scmp.ne.s32.totalorder %s113, %s127
      %p129 = scmp.eq.s32.totalorder %s35, 0
      %p130 = por %p128, %p129
      %s132 = sadd.s32 %s131, 1
      %p135 = scmp.eq.s32.totalorder %s29, 1
      %p136 = scmp.ne.s32.totalorder %s131, %s133
      %p137 = scmp.eq.s32.totalorder %s29, 0
      %p138 = por %p136, %p137
      %p139 = scmp.ne.s32.totalorder %s131, %s133
      %p140 = scmp.eq.s32.totalorder %s34, 1
      %p141 = por %p139, %p140
      %p142 = scmp.ne.s32.totalorder %s133, %s134
      %p143 = scmp.eq.s32.totalorder %s34, 0
      %p144 = por %p142, %p143
      %p145 = scmp.ne.s32.totalorder %s133, %s134
      %p146 = scmp.eq.s32.totalorder %s35, 1
      %p147 = por %p145, %p146
      %p149 = scmp.ne.s32.totalorder %s134, %s148
      %p150 = scmp.eq.s32.totalorder %s35, 0
      %p151 = por %p149, %p150
      %s153 = sadd.s32 %s152, 1
      %p156 = scmp.eq.s32.totalorder %s29, 1
      %p157 = scmp.ne.s32.totalorder %s152, %s154
      %p158 = scmp.eq.s32.totalorder %s29, 0
      %p159 = por %p157, %p158
      %p160 = scmp.ne.s32.totalorder %s152, %s154
      %p161 = scmp.eq.s32.totalorder %s34, 1
      %p162 = por %p160, %p161
      %p163 = scmp.ne.s32.totalorder %s154, %s155
      %p164 = scmp.eq.s32.totalorder %s34, 0
      %p165 = por %p163, %p164
      %p166 = scmp.ne.s32.totalorder %s154, %s155
      %p167 = scmp.eq.s32.totalorder %s35, 1
      %p168 = por %p166, %p167
      %p170 = scmp.ne.s32.totalorder %s155, %s169
      %p171 = scmp.eq.s32.totalorder %s35, 0
      %p172 = por %p170, %p171
      %s174 = sadd.s32 %s173, 1
      %p177 = scmp.eq.s32.totalorder %s29, 1
      %p178 = scmp.ne.s32.totalorder %s173, %s175
      %p179 = scmp.eq.s32.totalorder %s29, 0
      %p180 = por %p178, %p179
      %p181 = scmp.ne.s32.totalorder %s173, %s175
      %p182 = scmp.eq.s32.totalorder %s34, 1
      %p183 = por %p181, %p182
      %p184 = scmp.ne.s32.totalorder %s175, %s176
      %p185 = scmp.eq.s32.totalorder %s34, 0
      %p186 = por %p184, %p185
      %p187 = scmp.ne.s32.totalorder %s175, %s176
      %p188 = scmp.eq.s32.totalorder %s35, 1
      %p189 = por %p187, %p188
      %p191 = scmp.ne.s32.totalorder %s176, %s190
      %p192 = scmp.eq.s32.totalorder %s35, 0
      %p193 = por %p191, %p192
      %s195 = sadd.s32 %s194, 1
      %p198 = scmp.eq.s32.totalorder %s29, 1
      %p199 = scmp.ne.s32.totalorder %s194, %s196
      %p200 = scmp.eq.s32.totalorder %s29, 0
      %p201 = por %p199, %p200
      %p202 = scmp.ne.s32.totalorder %s194, %s196
      %p203 = scmp.eq.s32.totalorder %s34, 1
      %p204 = por %p202, %p203
      %p205 = scmp.ne.s32.totalorder %s196, %s197
      %p206 = scmp.eq.s32.totalorder %s34, 0
      %p207 = por %p205, %p206
      %p208 = scmp.ne.s32.totalorder %s196, %s197
      %p209 = scmp.eq.s32.totalorder %s35, 1
      %p210 = por %p208, %p209
      %p212 = scmp.ne.s32.totalorder %s197, %s211
      %p213 = scmp.eq.s32.totalorder %s35, 0
      %p214 = por %p212, %p213
      %s216 = sadd.s32 %s215, 1
      %p219 = scmp.eq.s32.totalorder %s29, 1
      %p220 = scmp.ne.s32.totalorder %s215, %s217
      %p221 = scmp.eq.s32.totalorder %s29, 0
      %p222 = por %p220, %p221
      %p223 = scmp.ne.s32.totalorder %s215, %s217
      %p224 = scmp.eq.s32.totalorder %s34, 1
      %p225 = por %p223, %p224
      %p226 = scmp.ne.s32.totalorder %s217, %s218
      %p227 = scmp.eq.s32.totalorder %s34, 0
      %p228 = por %p226, %p227
      %p229 = scmp.ne.s32.totalorder %s217, %s218
      %p230 = scmp.eq.s32.totalorder %s35, 1
      %p231 = por %p229, %p230
      %p233 = scmp.ne.s32.totalorder %s218, %s232
      %p234 = scmp.eq.s32.totalorder %s35, 0
      %p235 = por %p233, %p234
      %s237 = sadd.s32 %s236, 1
      %p240 = scmp.eq.s32.totalorder %s29, 1
      %p241 = scmp.ne.s32.totalorder %s236, %s238
      %p242 = scmp.eq.s32.totalorder %s29, 0
      %p243 = por %p241, %p242
      %p244 = scmp.ne.s32.totalorder %s236, %s238
      %p245 = scmp.eq.s32.totalorder %s34, 1
      %p246 = por %p244, %p245
      %p247 = scmp.ne.s32.totalorder %s238, %s239
      %p248 = scmp.eq.s32.totalorder %s34, 0
      %p249 = por %p247, %p248
      %p250 = scmp.ne.s32.totalorder %s238, %s239
      %p251 = scmp.eq.s32.totalorder %s35, 1
      %p252 = por %p250, %p251
      %p254 = scmp.ne.s32.totalorder %s239, %s253
      %p255 = scmp.eq.s32.totalorder %s35, 0
      %p256 = por %p254, %p255
      %s258 = sadd.s32 %s257, 1
      %p261 = scmp.eq.s32.totalorder %s29, 1
      %p262 = scmp.ne.s32.totalorder %s257, %s259
      %p263 = scmp.eq.s32.totalorder %s29, 0
      %p264 = por %p262, %p263
      %p265 = scmp.ne.s32.totalorder %s257, %s259
      %p266 = scmp.eq.s32.totalorder %s34, 1
      %p267 = por %p265, %p266
      %p268 = scmp.ne.s32.totalorder %s259, %s260
      %p269 = scmp.eq.s32.totalorder %s34, 0
      %p270 = por %p268, %p269
      %p271 = scmp.ne.s32.totalorder %s259, %s260
      %p272 = scmp.eq.s32.totalorder %s35, 1
      %p273 = por %p271, %p272
      %p275 = scmp.ne.s32.totalorder %s260, %s274
      %p276 = scmp.eq.s32.totalorder %s35, 0
      %p277 = por %p275, %p276
      %s279 = sadd.s32 %s278, 1
      %p282 = scmp.eq.s32.totalorder %s29, 1
      %p283 = scmp.ne.s32.totalorder %s278, %s280
      %p284 = scmp.eq.s32.totalorder %s29, 0
      %p285 = por %p283, %p284
      %p286 = scmp.ne.s32.totalorder %s278, %s280
      %p287 = scmp.eq.s32.totalorder %s34, 1
      %p288 = por %p286, %p287
      %p289 = scmp.ne.s32.totalorder %s280, %s281
      %p290 = scmp.eq.s32.totalorder %s34, 0
      %p291 = por %p289, %p290
      %p292 = scmp.ne.s32.totalorder %s280, %s281
      %p293 = scmp.eq.s32.totalorder %s35, 1
      %p294 = por %p292, %p293
      %p296 = scmp.ne.s32.totalorder %s281, %s295
      %p297 = scmp.eq.s32.totalorder %s35, 0
      %p298 = por %p296, %p297
      %s300 = sadd.s32 %s299, 1
      %p303 = scmp.eq.s32.totalorder %s29, 1
      %p304 = scmp.ne.s32.totalorder %s299, %s301
      %p305 = scmp.eq.s32.totalorder %s29, 0
      %p306 = por %p304, %p305
      %p307 = scmp.ne.s32.totalorder %s299, %s301
      %p308 = scmp.eq.s32.totalorder %s34, 1
      %p309 = por %p307, %p308
      %p310 = scmp.ne.s32.totalorder %s301, %s302
      %p311 = scmp.eq.s32.totalorder %s34, 0
      %p312 = por %p310, %p311
      %p313 = scmp.ne.s32.totalorder %s301, %s302
      %p314 = scmp.eq.s32.totalorder %s35, 1
      %p315 = por %p313, %p314
      %p317 = scmp.ne.s32.totalorder %s302, %s316
      %p318 = scmp.eq.s32.totalorder %s35, 0
      %p319 = por %p317, %p318
      %s321 = sadd.s32 %s320, 1
      %p324 = scmp.eq.s32.totalorder %s29, 1
      %p325 = scmp.ne.s32.totalorder %s320, %s322
      %p326 = scmp.eq.s32.totalorder %s29, 0
      %p327 = por %p325, %p326
      %p328 = scmp.ne.s32.totalorder %s320, %s322
      %p329 = scmp.eq.s32.totalorder %s34, 1
      %p330 = por %p328, %p329
      %p331 = scmp.ne.s32.totalorder %s322, %s323
      %p332 = scmp.eq.s32.totalorder %s34, 0
      %p333 = por %p331, %p332
      %p334 = scmp.ne.s32.totalorder %s322, %s323
      %p335 = scmp.eq.s32.totalorder %s35, 1
      %p336 = por %p334, %p335
      %p338 = scmp.ne.s32.totalorder %s323, %s337
      %p339 = scmp.eq.s32.totalorder %s35, 0
      %p340 = por %p338, %p339
      %s342 = sadd.s32 %s341, 1
      %p345 = scmp.eq.s32.totalorder %s29, 1
      %p346 = scmp.ne.s32.totalorder %s341, %s343
      %p347 = scmp.eq.s32.totalorder %s29, 0
      %p348 = por %p346, %p347
      %p349 = scmp.ne.s32.totalorder %s341, %s343
      %p350 = scmp.eq.s32.totalorder %s34, 1
      %p351 = por %p349, %p350
      %p352 = scmp.ne.s32.totalorder %s343, %s344
      %p353 = scmp.eq.s32.totalorder %s34, 0
      %p354 = por %p352, %p353
      %p355 = scmp.ne.s32.totalorder %s343, %s344
      %p356 = scmp.eq.s32.totalorder %s35, 1
      %p357 = por %p355, %p356
      %p359 = scmp.ne.s32.totalorder %s344, %s358
      %p360 = scmp.eq.s32.totalorder %s35, 0
      %p361 = por %p359, %p360
      %s363 = sadd.s32 %s362, 1
      %p366 = scmp.eq.s32.totalorder %s29, 1
      %p367 = scmp.ne.s32.totalorder %s362, %s364
      %p368 = scmp.eq.s32.totalorder %s29, 0
      %p369 = por %p367, %p368
      %p370 = scmp.ne.s32.totalorder %s362, %s364
      %p371 = scmp.eq.s32.totalorder %s34, 1
      %p372 = por %p370, %p371
      %p373 = scmp.ne.s32.totalorder %s364, %s365
      %p374 = scmp.eq.s32.totalorder %s34, 0
      %p375 = por %p373, %p374
      %p376 = scmp.ne.s32.totalorder %s364, %s365
      %p377 = scmp.eq.s32.totalorder %s35, 1
      %p378 = por %p376, %p377
      %p380 = scmp.ne.s32.totalorder %s365, %s379
      %p381 = scmp.eq.s32.totalorder %s35, 0
      %p382 = por %p380, %p381
      %s383 = ssub.s32 %s29, %s36
      %p384 = scmp.eq.s32.totalorder %s383, 0
      %s386 = sadd.s32 %s385, 1
      %s387 = scalar_select %p384, %s385, %s386
      %p390 = pneg %p384
      %p391 = scmp.eq.s32.totalorder %s29, 1
      %p392 = por %p390, %p391
      %p393 = scmp.ne.s32.totalorder %s385, %s388
      %p394 = scmp.eq.s32.totalorder %s29, 0
      %p395 = por %p393, %p394
      %p396 = scmp.ne.s32.totalorder %s385, %s388
      %p397 = scmp.eq.s32.totalorder %s34, 1
      %p398 = por %p396, %p397
      %p399 = scmp.ne.s32.totalorder %s388, %s389
      %p400 = scmp.eq.s32.totalorder %s34, 0
      %p401 = por %p399, %p400
      %p402 = scmp.ne.s32.totalorder %s388, %s389
      %p403 = scmp.eq.s32.totalorder %s35, 1
      %p404 = por %p402, %p403
      %p406 = scmp.ne.s32.totalorder %s389, %s405
      %p407 = scmp.eq.s32.totalorder %s35, 0
      %p408 = por %p406, %p407
      %p409 = scmp.le.s32.totalorder 1, %s29
      %p410 = scmp.lt.s32.totalorder %s29, 3
      %p411 = pnand %p409, %p410
      %p412 = pneg %p411
      // Predicated region
      $region9: #{tpu_custom_call.1} parent=5 // pred_check
        _
      $region10: #{tpu_custom_call.1} parent=5 // pred_check_branch
        %414 = sbr.rel (%p411) target = $region12
      $region11: #{tpu_custom_call.1} parent=5 // pred_region
        %s415 = ssub.s32 %s29, 1
        // Predicated region
        $region13: #{tpu_custom_call.1} parent=11 // pred_check
          %p416 = pneg %p102
        $region14: #{tpu_custom_call.1} parent=11 // pred_check_branch
          %418 = sbr.rel (%p416) target = $region16
        $region15: #{tpu_custom_call.1} parent=11 // pred_region
          _
        $region16: #{tpu_custom_call.1} parent=11 // pred_fallthru
          _
        // Predicated region
        $region17: #{tpu_custom_call.1} parent=11 // pred_check
          %p419 = pneg %p123
        $region18: #{tpu_custom_call.1} parent=11 // pred_check_branch
          %421 = sbr.rel (%p419) target = $region20
        $region19: #{tpu_custom_call.1} parent=11 // pred_region
          %s423 = ssub.s32 16, 16
          %424 = vsyncadd [#allocation7], %s423
          %s426 = sshll.u32 [#allocation6], 4
          %s427 = int_to_ptr.vmem [resolvable:$true] %s426
          %429 = dma.hbm_to_vmem [thread:$0]  %s3, 16, %s427, [#allocation7]
        $region20: #{tpu_custom_call.1} parent=11 // pred_fallthru
          _
        // Predicated region
        $region21: #{tpu_custom_call.1} parent=11 // pred_check
          %p430 = pneg %p144
        $region22: #{tpu_custom_call.1} parent=11 // pred_check_branch
          %432 = sbr.rel (%p430) target = $region24
        $region23: #{tpu_custom_call.1} parent=11 // pred_region
          %s434 = ssub.s32 256, 256
          %435 = vsyncadd [#allocation10], %s434
          %s436 = sshll.u32 [#allocation9], 4
          %s437 = int_to_ptr.vmem [resolvable:$true] %s436
          %442 = dma.hbm_to_vmem [thread:$0]  %s4, 256, %s437, [#allocation10], 64, 64, 4
        $region24: #{tpu_custom_call.1} parent=11 // pred_fallthru
          _
        // Predicated region
        $region25: #{tpu_custom_call.1} parent=11 // pred_check
          %p443 = pneg %p165
        $region26: #{tpu_custom_call.1} parent=11 // pred_check_branch
          %445 = sbr.rel (%p443) target = $region28
        $region27: #{tpu_custom_call.1} parent=11 // pred_region
          %s447 = ssub.s32 16, 16
          %448 = vsyncadd [#allocation10], %s447
          %s450 = sshll.u32 [#allocation11], 4
          %s451 = int_to_ptr.vmem [resolvable:$true] %s450
          %453 = dma.hbm_to_vmem [thread:$0]  %s5, 16, %s451, [#allocation10]
        $region28: #{tpu_custom_call.1} parent=11 // pred_fallthru
          _
        // Predicated region
        $region29: #{tpu_custom_call.1} parent=11 // pred_check
          %p454 = pneg %p186
        $region30: #{tpu_custom_call.1} parent=11 // pred_check_branch
          %456 = sbr.rel (%p454) target = $region32
        $region31: #{tpu_custom_call.1} parent=11 // pred_region
          %s458 = ssub.s32 256, 256
          %459 = vsyncadd [#allocation13], %s458
          %s460 = sshll.u32 [#allocation12], 4
          %s461 = int_to_ptr.vmem [resolvable:$true] %s460
          %466 = dma.hbm_to_vmem [thread:$0]  %s6, 256, %s461, [#allocation13], 64, 64, 4
        $region32: #{tpu_custom_call.1} parent=11 // pred_fallthru
          _
        // Predicated region
        $region33: #{tpu_custom_call.1} parent=11 // pred_check
          %p467 = pneg %p207
        $region34: #{tpu_custom_call.1} parent=11 // pred_check_branch
          %469 = sbr.rel (%p467) target = $region36
        $region35: #{tpu_custom_call.1} parent=11 // pred_region
          %s471 = ssub.s32 16, 16
          %472 = vsyncadd [#allocation13], %s471
          %s474 = sshll.u32 [#allocation14], 4
          %s475 = int_to_ptr.vmem [resolvable:$true] %s474
          %477 = dma.hbm_to_vmem [thread:$0]  %s7, 16, %s475, [#allocation13]
        $region36: #{tpu_custom_call.1} parent=11 // pred_fallthru
          _
        // Predicated region
        $region37: #{tpu_custom_call.1} parent=11 // pred_check
          %p478 = pneg %p228
        $region38: #{tpu_custom_call.1} parent=11 // pred_check_branch
          %480 = sbr.rel (%p478) target = $region40
        $region39: #{tpu_custom_call.1} parent=11 // pred_region
          %s482 = ssub.s32 16, 16
          %483 = vsyncadd [#allocation16], %s482
          %s485 = sshll.u32 [#allocation15], 4
          %s486 = int_to_ptr.vmem [resolvable:$true] %s485
          %488 = dma.hbm_to_vmem [thread:$0]  %s8, 16, %s486, [#allocation16]
        $region40: #{tpu_custom_call.1} parent=11 // pred_fallthru
          _
        // Predicated region
        $region41: #{tpu_custom_call.1} parent=11 // pred_check
          %p489 = pneg %p249
        $region42: #{tpu_custom_call.1} parent=11 // pred_check_branch
          %491 = sbr.rel (%p489) target = $region44
        $region43: #{tpu_custom_call.1} parent=11 // pred_region
          %s493 = ssub.s32 16, 16
          %494 = vsyncadd [#allocation16], %s493
          %s496 = sshll.u32 [#allocation17], 4
          %s497 = int_to_ptr.vmem [resolvable:$true] %s496
          %499 = dma.hbm_to_vmem [thread:$0]  %s9, 16, %s497, [#allocation16]
        $region44: #{tpu_custom_call.1} parent=11 // pred_fallthru
          _
        // Predicated region
        $region45: #{tpu_custom_call.1} parent=11 // pred_check
          %p500 = pneg %p270
        $region46: #{tpu_custom_call.1} parent=11 // pred_check_branch
          %502 = sbr.rel (%p500) target = $region48
        $region47: #{tpu_custom_call.1} parent=11 // pred_region
          _
        $region48: #{tpu_custom_call.1} parent=11 // pred_fallthru
          _
        // Predicated region
        $region49: #{tpu_custom_call.1} parent=11 // pred_check
          %p503 = pneg %p291
        $region50: #{tpu_custom_call.1} parent=11 // pred_check_branch
          %505 = sbr.rel (%p503) target = $region52
        $region51: #{tpu_custom_call.1} parent=11 // pred_region
          _
        $region52: #{tpu_custom_call.1} parent=11 // pred_fallthru
          _
        // Predicated region
        $region53: #{tpu_custom_call.1} parent=11 // pred_check
          %p506 = pneg %p312
        $region54: #{tpu_custom_call.1} parent=11 // pred_check_branch
          %508 = sbr.rel (%p506) target = $region56
        $region55: #{tpu_custom_call.1} parent=11 // pred_region
          _
        $region56: #{tpu_custom_call.1} parent=11 // pred_fallthru
          _
        // Predicated region
        $region57: #{tpu_custom_call.1} parent=11 // pred_check
          %p509 = pneg %p333
        $region58: #{tpu_custom_call.1} parent=11 // pred_check_branch
          %511 = sbr.rel (%p509) target = $region60
        $region59: #{tpu_custom_call.1} parent=11 // pred_region
          _
        $region60: #{tpu_custom_call.1} parent=11 // pred_fallthru
          _
        // Predicated region
        $region61: #{tpu_custom_call.1} parent=11 // pred_check
          %p512 = pneg %p354
        $region62: #{tpu_custom_call.1} parent=11 // pred_check_branch
          %514 = sbr.rel (%p512) target = $region64
        $region63: #{tpu_custom_call.1} parent=11 // pred_region
          _
        $region64: #{tpu_custom_call.1} parent=11 // pred_fallthru
          _
        // Predicated region
        $region65: #{tpu_custom_call.1} parent=11 // pred_check
          %p515 = pneg %p375
        $region66: #{tpu_custom_call.1} parent=11 // pred_check_branch
          %517 = sbr.rel (%p515) target = $region68
        $region67: #{tpu_custom_call.1} parent=11 // pred_region
          _
        $region68: #{tpu_custom_call.1} parent=11 // pred_fallthru
          _
      $region12: #{tpu_custom_call.1} parent=5 // pred_fallthru
        _
      %p518 = scmp.lt.s32.totalorder %s29, 2
      // Predicated region
      $region69: #{tpu_custom_call.1} parent=5 // pred_check
        %p519 = pneg %p518
      $region70: #{tpu_custom_call.1} parent=5 // pred_check_branch
        %521 = sbr.rel (%p519) target = $region72
      $region71: #{tpu_custom_call.1} parent=5 // pred_region
        // Predicated region
        $region73: #{tpu_custom_call.1} parent=71 // pred_check
          %p522 = pneg %p49
        $region74: #{tpu_custom_call.1} parent=71 // pred_check_branch
          %524 = sbr.rel (%p522) target = $region76
        $region75: #{tpu_custom_call.1} parent=71 // pred_region
          %p525 = scmp.lt.s32.totalorder %s29, 1
          %s526 = scalar_select %p525, %s29, 1
          %s527 = smul.addr %s526, 8
          %s528 = scalar_lea.vmem %s0, %s527
        $region76: #{tpu_custom_call.1} parent=71 // pred_fallthru
          _
        // Predicated region
        $region77: #{tpu_custom_call.1} parent=71 // pred_check
          %p529 = pneg %p75
        $region78: #{tpu_custom_call.1} parent=71 // pred_check_branch
          %531 = sbr.rel (%p529) target = $region80
        $region79: #{tpu_custom_call.1} parent=71 // pred_region
          %p532 = scmp.lt.s32.totalorder %s29, 1
          %s533 = scalar_select %p532, %s29, 1
          %s534 = smul.addr %s533, 8
          %s535 = scalar_lea.vmem %s1, %s534
        $region80: #{tpu_custom_call.1} parent=71 // pred_fallthru
          _
      $region72: #{tpu_custom_call.1} parent=5 // pred_fallthru
        _
      %p536 = scmp.le.s32.totalorder 1, %s29
      %p537 = scmp.lt.s32.totalorder %s29, 3
      %p538 = pnand %p536, %p537
      %p539 = pneg %p538
      // Predicated region
      $region81: #{tpu_custom_call.1} parent=5 // pred_check
        _
      $region82: #{tpu_custom_call.1} parent=5 // pred_check_branch
        %541 = sbr.rel (%p538) target = $region84
      $region83: #{tpu_custom_call.1} parent=5 // pred_region
        %s542 = ssub.s32 %s29, 1
        // Predicated region
        $region85: #{tpu_custom_call.1} parent=83 // pred_check
          %p543 = pneg %p123
        $region86: #{tpu_custom_call.1} parent=83 // pred_check_branch
          %545 = sbr.rel (%p543) target = $region88
        $region87: #{tpu_custom_call.1} parent=83 // pred_region
          %546 = dma.done [#allocation7], 16
        $region88: #{tpu_custom_call.1} parent=83 // pred_fallthru
          _
        // Predicated region
        $region89: #{tpu_custom_call.1} parent=83 // pred_check
          %p547 = pneg %p144
        $region90: #{tpu_custom_call.1} parent=83 // pred_check_branch
          %549 = sbr.rel (%p547) target = $region92
        $region91: #{tpu_custom_call.1} parent=83 // pred_region
          %550 = dma.done [#allocation10], 256
        $region92: #{tpu_custom_call.1} parent=83 // pred_fallthru
          _
        // Predicated region
        $region93: #{tpu_custom_call.1} parent=83 // pred_check
          %p551 = pneg %p165
        $region94: #{tpu_custom_call.1} parent=83 // pred_check_branch
          %553 = sbr.rel (%p551) target = $region96
        $region95: #{tpu_custom_call.1} parent=83 // pred_region
          %554 = dma.done [#allocation10], 16
        $region96: #{tpu_custom_call.1} parent=83 // pred_fallthru
          _
        // Predicated region
        $region97: #{tpu_custom_call.1} parent=83 // pred_check
          %p555 = pneg %p186
        $region98: #{tpu_custom_call.1} parent=83 // pred_check_branch
          %557 = sbr.rel (%p555) target = $region100
        $region99: #{tpu_custom_call.1} parent=83 // pred_region
          %558 = dma.done [#allocation13], 256
        $region100: #{tpu_custom_call.1} parent=83 // pred_fallthru
          _
        // Predicated region
        $region101: #{tpu_custom_call.1} parent=83 // pred_check
          %p559 = pneg %p207
        $region102: #{tpu_custom_call.1} parent=83 // pred_check_branch
          %561 = sbr.rel (%p559) target = $region104
        $region103: #{tpu_custom_call.1} parent=83 // pred_region
          %562 = dma.done [#allocation13], 16
        $region104: #{tpu_custom_call.1} parent=83 // pred_fallthru
          _
        // Predicated region
        $region105: #{tpu_custom_call.1} parent=83 // pred_check
          %p563 = pneg %p228
        $region106: #{tpu_custom_call.1} parent=83 // pred_check_branch
          %565 = sbr.rel (%p563) target = $region108
        $region107: #{tpu_custom_call.1} parent=83 // pred_region
          %566 = dma.done [#allocation16], 16
        $region108: #{tpu_custom_call.1} parent=83 // pred_fallthru
          _
        // Predicated region
        $region109: #{tpu_custom_call.1} parent=83 // pred_check
          %p567 = pneg %p249
        $region110: #{tpu_custom_call.1} parent=83 // pred_check_branch
          %569 = sbr.rel (%p567) target = $region112
        $region111: #{tpu_custom_call.1} parent=83 // pred_region
          %570 = dma.done [#allocation16], 16
        $region112: #{tpu_custom_call.1} parent=83 // pred_fallthru
          _
        %p571 = scmp.lt.s32.totalorder %s34, 1
        %s572 = scalar_select %p571, %s34, 1
        %s573 = smul.addr %s572, 8
        %s574 = scalar_lea.vmem %s0, %s573
        %p575 = pneg %p55
        %p576 = pneg %p52
        %p577 = scmp.lt.s32.totalorder %s34, 1
        %s578 = scalar_select %p577, %s34, 1
        %s579 = smul.addr %s578, 8
        %s580 = scalar_lea.vmem %s1, %s579
        %p581 = pneg %p81
        %p582 = pneg %p78
        %p583 = pneg %p102
        %p584 = pneg %p99
        %p585 = pneg %p123
        %p586 = pneg %p120
        %p587 = pneg %p144
        %p588 = pneg %p141
        %p589 = pneg %p165
        %p590 = pneg %p162
        %p591 = pneg %p186
        %p592 = pneg %p183
        %p593 = pneg %p207
        %p594 = pneg %p204
        %p595 = pneg %p228
        %p596 = pneg %p225
        %p597 = pneg %p249
        %p598 = pneg %p246
        %p599 = pneg %p270
        %p600 = pneg %p267
        %p601 = pneg %p291
        %p602 = pneg %p288
        %p603 = pneg %p312
        %p604 = pneg %p309
        %p605 = pneg %p333
        %p606 = pneg %p330
        %p607 = pneg %p354
        %p608 = pneg %p351
        %p609 = pneg %p375
        %p610 = pneg %p372
        %p611 = pneg %p401
        %p612 = pneg %p398
        %s613 = sand.u32 %s388, 1
        %s614 = scalar_lea.sflag [#allocation8], %s613
        %s615 = sand.u32 %s388, 1
        %s616 = smul.addr %s615, 8
        %s617 = scalar_lea.vmem [#allocation18], %s616
        %p618 = scmp.lt.s32.totalorder %s34, 1
        %s619 = scalar_select %p618, %s34, 1
        %s620 = smul.addr %s619, 8
        %s621 = scalar_lea.vmem %s0, %s620
        %p622 = scmp.lt.s32.totalorder %s34, 1
        %s623 = scalar_select %p622, %s34, 1
        %s624 = smul.addr %s623, 8
        %s625 = scalar_lea.vmem %s1, %s624
        %v627 = vld [vmem:[%s621] sm:$0xff]
        %v628 = vld [vmem:[%s625] sm:$0xff]
        %v629 = vadd.f32 %v627, %v628
        %v630 = vpack.c.bf16 %v629, %v629
        %v631 = vpack.c.bf16 %v627, %v627
        %v632 = vld [vmem:[%s2] sm:$0xf]
        %v633 = vld [vmem:[%s2 + $0x4] sm:$0xf]
        %v634 = vld [vmem:[%s2 + $0x8] sm:$0xf]
        %v635 = vld [vmem:[%s2 + $0xc] sm:$0xf]
        %v636 = vld [vmem:[#allocation6] sm:$0x1]
        %v638 = vlaneseq
        %v639 = vshrl.u32 %v638, 7
        %v640 = vsub.s32 0, %v639
        %v641 = vrot.slane %v636, %v640
        %v647 = vunpack.c.l.b16 %v632
        %v648 = vunpack.c.l.b16 %v633
        %v649 = vunpack.c.l.b16 %v634
        %v650 = vunpack.c.l.b16 %v635
        %v651 = vpack.c.b16 %v648, %v647
        %v652 = vpack.c.b16 %v650, %v649
        %vm655 = vcmask 261120
        %v657 = vsel %vm655, %v630, 0
        %659 = vmatprep.subr.bf16.mxu0 0
        %660 = vmatpush1.bf16.msra.mxu0 0
        %661 = vmatprep.subr.bf16.mxu0 0
        %662 = vmatpush1.bf16.msra.mxu0 0
        %663 = vmatprep.subr.bf16.mxu0 0
        %664 = vmatpush1.bf16.msra.mxu0 0
        %665 = vmatprep.subr.bf16.mxu0 0
        %666 = vmatpush1.bf16.msra.mxu0 0
        %667 = vmatprep.subr.bf16.mxu0 0
        %668 = vmatpush1.bf16.msra.mxu0 0
        %669 = vmatprep.subr.bf16.mxu0 0
        %670 = vmatpush1.bf16.msra.mxu0 0
        %671 = vmatprep.subr.bf16.mxu0 0
        %672 = vmatpush1.bf16.msra.mxu0 %v652
        %673 = vmatprep.subr.bf16.mxu0 0
        %674 = vmatpush1.bf16.msra.mxu0 %v651
        %675 = vmatprep.subr.bf16.mxu0 0
        %676 = vmatpush2.bf16.msra.mxu0 0
        %677 = vmatprep.subr.bf16.mxu0 0
        %678 = vmatpush2.bf16.msra.mxu0 0
        %679 = vmatprep.subr.bf16.mxu0 0
        %680 = vmatpush2.bf16.msra.mxu0 0
        %681 = vmatprep.subr.bf16.mxu0 0
        %682 = vmatpush2.bf16.msra.mxu0 0
        %683 = vmatprep.subr.bf16.mxu0 0
        %684 = vmatpush2.bf16.msra.mxu0 0
        %685 = vmatprep.subr.bf16.mxu0 0
        %686 = vmatpush2.bf16.msra.mxu0 0
        %687 = vmatprep.subr.bf16.mxu0 0
        %688 = vmatpush2.bf16.msra.mxu0 0
        %689 = vmatprep.subr.bf16.mxu0 0
        %690 = vmatpush2.bf16.msra.mxu0 0
        %691 = vmatprep.mubr.bf16.mxu0 0
        %692 = vmatmul.mubr.bf16.gmra.mxu0 %v657
        %v693 = vpop.f32.mrf.mxu0
        %v694 = vadd.f32 %v641, %v693
        %v695 = vpop.f32.mrf.mxu0
        %v696 = vpop.f32.mrf.mxu0
        %v697 = vpop.f32.mrf.mxu0
        %698 = vdwg.mxu0
        %v699 = vld [vmem:[#allocation9] sm:$0xf]
        %v700 = vld [vmem:[#allocation9 + $0x4] sm:$0xf]
        %v701 = vld [vmem:[#allocation9 + $0x8] sm:$0xf]
        %v702 = vld [vmem:[#allocation9 + $0xc] sm:$0xf]
        %v703 = vld [vmem:[#allocation11] sm:$0x1]
        %v705 = vlaneseq
        %v706 = vshrl.u32 %v705, 7
        %v707 = vsub.s32 0, %v706
        %v708 = vrot.slane %v703, %v707
        %v714 = vunpack.c.l.b16 %v699
        %v715 = vunpack.c.l.b16 %v700
        %v716 = vunpack.c.l.b16 %v701
        %v717 = vunpack.c.l.b16 %v702
        %v718 = vpack.c.b16 %v715, %v714
        %v719 = vpack.c.b16 %v717, %v716
        %v723 = vsel %vm655, %v631, 0
        %725 = vmatprep.subr.bf16.mxu0 0
        %726 = vmatpush1.bf16.msra.mxu0 0
        %727 = vmatprep.subr.bf16.mxu0 0
        %728 = vmatpush1.bf16.msra.mxu0 0
        %729 = vmatprep.subr.bf16.mxu0 0
        %730 = vmatpush1.bf16.msra.mxu0 0
        %731 = vmatprep.subr.bf16.mxu0 0
        %732 = vmatpush1.bf16.msra.mxu0 0
        %733 = vmatprep.subr.bf16.mxu0 0
        %734 = vmatpush1.bf16.msra.mxu0 0
        %735 = vmatprep.subr.bf16.mxu0 0
        %736 = vmatpush1.bf16.msra.mxu0 0
        %737 = vmatprep.subr.bf16.mxu0 0
        %738 = vmatpush1.bf16.msra.mxu0 %v719
        %739 = vmatprep.subr.bf16.mxu0 0
        %740 = vmatpush1.bf16.msra.mxu0 %v718
        %741 = vmatprep.subr.bf16.mxu0 0
        %742 = vmatpush2.bf16.msra.mxu0 0
        %743 = vmatprep.subr.bf16.mxu0 0
        %744 = vmatpush2.bf16.msra.mxu0 0
        %745 = vmatprep.subr.bf16.mxu0 0
        %746 = vmatpush2.bf16.msra.mxu0 0
        %747 = vmatprep.subr.bf16.mxu0 0
        %748 = vmatpush2.bf16.msra.mxu0 0
        %749 = vmatprep.subr.bf16.mxu0 0
        %750 = vmatpush2.bf16.msra.mxu0 0
        %751 = vmatprep.subr.bf16.mxu0 0
        %752 = vmatpush2.bf16.msra.mxu0 0
        %753 = vmatprep.subr.bf16.mxu0 0
        %754 = vmatpush2.bf16.msra.mxu0 0
        %755 = vmatprep.subr.bf16.mxu0 0
        %756 = vmatpush2.bf16.msra.mxu0 0
        %757 = vmatprep.mubr.bf16.mxu0 0
        %758 = vmatmul.mubr.bf16.gmra.mxu0 %v723
        %v759 = vpop.f32.mrf.mxu0
        %v760 = vadd.f32 %v708, %v759
        %v761 = vpop.f32.mrf.mxu0
        %v762 = vpop.f32.mrf.mxu0
        %v763 = vpop.f32.mrf.mxu0
        %764 = vdwg.mxu0
        %v765 = vpack.c.bf16 %v694, %v694
        %vm766 = vcmask 60416
        %767 = vst.msk [vmem:[#allocation2] sm:$0xf] %vm766, %v765
        %v769 = vunpack.c.l.b16 %v765
        %v770 = vpack.c.b16 %v769, %v769
        %771 = vrot.lane.b32.xlu0 %v770, 96
        %v772 = vpop.permute.xlu0 %771
        %774 = vst.msk [vmem:[#allocation3] sm:$0xf] %vm766, %v772
        %v775 = vpack.c.bf16 %v760, %v760
        %776 = vst.msk [vmem:[#allocation4] sm:$0xf] %vm766, %v775
        %777 = vrot.lane.b32.xlu0 %v770, 120
        %v778 = vpop.permute.xlu0 %777
        %s780 = scalar_lea.vmem [#allocation2], 4
        %781 = vst.msk [vmem:[%s780] sm:$0xf] %vm766, %v778
        %782 = vrot.lane.b32.xlu0 %v770, 88
        %v783 = vpop.permute.xlu0 %782
        %s785 = scalar_lea.vmem [#allocation3], 4
        %786 = vst.msk [vmem:[%s785] sm:$0xf] %vm766, %v783
        %v788 = vunpack.c.l.b16 %v775
        %v789 = vpack.c.b16 %v788, %v788
        %790 = vrot.lane.b32.xlu0 %v789, 120
        %v791 = vpop.permute.xlu0 %790
        %s793 = scalar_lea.vmem [#allocation4], 4
        %794 = vst.msk [vmem:[%s793] sm:$0xf] %vm766, %v791
        %795 = vrot.lane.b32.xlu0 %v770, 112
        %v796 = vpop.permute.xlu0 %795
        %s798 = scalar_lea.vmem [#allocation2], 8
        %799 = vst.msk [vmem:[%s798] sm:$0xf] %vm766, %v796
        %800 = vrot.lane.b32.xlu0 %v770, 80
        %v801 = vpop.permute.xlu0 %800
        %s803 = scalar_lea.vmem [#allocation3], 8
        %804 = vst.msk [vmem:[%s803] sm:$0xf] %vm766, %v801
        %805 = vrot.lane.b32.xlu0 %v789, 112
        %v806 = vpop.permute.xlu0 %805
        %s808 = scalar_lea.vmem [#allocation4], 8
        %809 = vst.msk [vmem:[%s808] sm:$0xf] %vm766, %v806
        %810 = vrot.lane.b32.xlu0 %v770, 104
        %v811 = vpop.permute.xlu0 %810
        %s813 = scalar_lea.vmem [#allocation2], 12
        %814 = vst.msk [vmem:[%s813] sm:$0xf] %vm766, %v811
        %815 = vrot.lane.b32.xlu0 %v770, 72
        %v816 = vpop.permute.xlu0 %815
        %s818 = scalar_lea.vmem [#allocation3], 12
        %819 = vst.msk [vmem:[%s818] sm:$0xf] %vm766, %v816
        %820 = vrot.lane.b32.xlu0 %v789, 104
        %v821 = vpop.permute.xlu0 %820
        %s823 = scalar_lea.vmem [#allocation4], 12
        %824 = vst.msk [vmem:[%s823] sm:$0xf] %vm766, %v821
        loop: start=0, step=1, limit=4
        $region113: #{tpu_custom_call.1} parent=83 // loop_pre_header
          _
        $region114: #{tpu_custom_call.1} parent=83 // loop_header
          %s826 = sphi 0, %s830
          %p827 = scmp.ge.s32.totalorder %s826, 4
        $region115: #{tpu_custom_call.1} parent=83 // loop_header_branch
          %829 = sbr.rel (%p827) target = $region119
        $region116: #{tpu_custom_call.1} parent=83 // loop_body
          %s831 = smul.addr %s826, 4
          %s832 = scalar_lea.vmem [#allocation2], %s831
          %v833 = vld [vmem:[%s832] sm:$0xf]
          %s834 = smul.addr %s826, 4
          %s835 = scalar_lea.vmem [#allocation3], %s834
          %v836 = vld [vmem:[%s835] sm:$0xf]
          %s837 = smul.addr %s826, 4
          %s838 = scalar_lea.vmem [#allocation4], %s837
          %v839 = vld [vmem:[%s838] sm:$0xf]
          %vm840 = vcmask 64512
          %v842 = vsel %vm840, %v833, 0
          %v845 = vsel %vm840, %v836, 0
          %847 = vmatprep.subr.bf16.mxu0 0
          %848 = vmatpush1.bf16.xpose.msra.mxu0 0
          %849 = vmatprep.subr.bf16.mxu0 0
          %850 = vmatpush1.bf16.xpose.msra.mxu0 0
          %851 = vmatprep.subr.bf16.mxu0 0
          %852 = vmatpush1.bf16.xpose.msra.mxu0 0
          %853 = vmatprep.subr.bf16.mxu0 0
          %854 = vmatpush1.bf16.xpose.msra.mxu0 0
          %855 = vmatprep.subr.bf16.mxu0 0
          %856 = vmatpush1.bf16.xpose.msra.mxu0 0
          %857 = vmatprep.subr.bf16.mxu0 0
          %858 = vmatpush1.bf16.xpose.msra.mxu0 0
          %859 = vmatprep.subr.bf16.mxu0 0
          %860 = vmatpush1.bf16.xpose.msra.mxu0 0
          %861 = vmatprep.subr.bf16.mxu0 0
          %862 = vmatpush1.bf16.xpose.msra.mxu0 %v845
          %863 = vmatprep.subr.bf16.mxu0 0
          %864 = vmatpush2.bf16.xpose.msra.mxu0 0
          %865 = vmatprep.subr.bf16.mxu0 0
          %866 = vmatpush2.bf16.xpose.msra.mxu0 0
          %867 = vmatprep.subr.bf16.mxu0 0
          %868 = vmatpush2.bf16.xpose.msra.mxu0 0
          %869 = vmatprep.subr.bf16.mxu0 0
          %870 = vmatpush2.bf16.xpose.msra.mxu0 0
          %871 = vmatprep.subr.bf16.mxu0 0
          %872 = vmatpush2.bf16.xpose.msra.mxu0 0
          %873 = vmatprep.subr.bf16.mxu0 0
          %874 = vmatpush2.bf16.xpose.msra.mxu0 0
          %875 = vmatprep.subr.bf16.mxu0 0
          %876 = vmatpush2.bf16.xpose.msra.mxu0 0
          %877 = vmatprep.subr.bf16.mxu0 0
          %878 = vmatpush2.bf16.xpose.msra.mxu0 0
          %879 = vmatprep.mubr.bf16.mxu0 0
          %880 = vmatmul.mubr.bf16.gmra.mxu0 %v842
          %v881 = vpop.f32.mrf.mxu0
          %v882 = vadd.f32 0.0, %v881
          %v883 = vpop.f32.mrf.mxu0
          %v884 = vpop.f32.mrf.mxu0
          %v885 = vpop.f32.mrf.mxu0
          %886 = vdwg.mxu0
          %v887 = vsel %vm840, %v882, -inf
          %888 = vmax.xlane.f32.xlu0 %v887
          %v889 = vpop.xlane.xlu0 %888
          %v890 = vsub.f32 %v882, %v889
          %v891 = vmul.f32 %v890, 1.442695
          %v892 = vpow.pop %v891
          %v893 = vsel %vm840, %v892, 0.0
          %894 = vadd.xlane.f32.xlu0 %v893
          %v895 = vpop.xlane.xlu0 %894
          %v896 = vpack.c.bf16 %v892, %v892
          %v898 = vsel %vm840, %v896, 0
          %vm900 = vcmask 1043456
          %v902 = vsel %vm900, %v839, 0
          %904 = vmatprep.subr.bf16.mxu0 0
          %905 = vmatpush1.bf16.msra.mxu0 0
          %906 = vmatprep.subr.bf16.mxu0 0
          %907 = vmatpush1.bf16.msra.mxu0 0
          %908 = vmatprep.subr.bf16.mxu0 0
          %909 = vmatpush1.bf16.msra.mxu0 0
          %910 = vmatprep.subr.bf16.mxu0 0
          %911 = vmatpush1.bf16.msra.mxu0 0
          %912 = vmatprep.subr.bf16.mxu0 0
          %913 = vmatpush1.bf16.msra.mxu0 0
          %914 = vmatprep.subr.bf16.mxu0 0
          %915 = vmatpush1.bf16.msra.mxu0 0
          %916 = vmatprep.subr.bf16.mxu0 0
          %917 = vmatpush1.bf16.msra.mxu0 0
          %918 = vmatprep.subr.bf16.mxu0 0
          %919 = vmatpush1.bf16.msra.mxu0 %v902
          %920 = vmatprep.subr.bf16.mxu0 0
          %921 = vmatpush2.bf16.msra.mxu0 0
          %922 = vmatprep.subr.bf16.mxu0 0
          %923 = vmatpush2.bf16.msra.mxu0 0
          %924 = vmatprep.subr.bf16.mxu0 0
          %925 = vmatpush2.bf16.msra.mxu0 0
          %926 = vmatprep.subr.bf16.mxu0 0
          %927 = vmatpush2.bf16.msra.mxu0 0
          %928 = vmatprep.subr.bf16.mxu0 0
          %929 = vmatpush2.bf16.msra.mxu0 0
          %930 = vmatprep.subr.bf16.mxu0 0
          %931 = vmatpush2.bf16.msra.mxu0 0
          %932 = vmatprep.subr.bf16.mxu0 0
          %933 = vmatpush2.bf16.msra.mxu0 0
          %934 = vmatprep.subr.bf16.mxu0 0
          %935 = vmatpush2.bf16.msra.mxu0 0
          %936 = vmatprep.mubr.bf16.mxu0 0
          %937 = vmatmul.mubr.bf16.gmra.mxu0 %v898
          %v938 = vpop.f32.mrf.mxu0
          %v939 = vadd.f32 0.0, %v938
          %v940 = vpop.f32.mrf.mxu0
          %v941 = vpop.f32.mrf.mxu0
          %v942 = vpop.f32.mrf.mxu0
          %943 = vdwg.mxu0
          %v944 = vrcp.pop %v895
          %v945 = vmul.f32 %v939, %v944
          %v946 = vpack.c.bf16 %v945, %v945
          %s947 = smul.addr %s826, 4
          %s948 = scalar_lea.vmem [#allocation5], %s947
          %949 = vst.msk [vmem:[%s948] sm:$0xf] %vm766, %v946
        $region117: #{tpu_custom_call.1} parent=83 // loop_footer
          %s830 = sadd.s32 1, %s826
        $region118: #{tpu_custom_call.1} parent=83 // loop_footer_branch
          %825 = sbr.rel target = $region114
        $region119: #{tpu_custom_call.1} parent=83 // loop_exit
          _
        %v950 = vld [vmem:[#allocation5] sm:$0xf]
        %s951 = scalar_lea.vmem [#allocation5], 4
        %v952 = vld [vmem:[%s951] sm:$0xf]
        %s953 = scalar_lea.vmem [#allocation5], 8
        %v954 = vld [vmem:[%s953] sm:$0xf]
        %s955 = scalar_lea.vmem [#allocation5], 12
        %v956 = vld [vmem:[%s955] sm:$0xf]
        %v958 = vunpack.c.l.b16 %v952
        %v959 = vpack.c.b16 %v958, %v958
        %960 = vrot.lane.b32.xlu0 %v959, 8
        %v961 = vpop.permute.xlu0 %960
        %v963 = vunpack.c.l.b16 %v954
        %v964 = vpack.c.b16 %v963, %v963
        %965 = vrot.lane.b32.xlu0 %v964, 16
        %v966 = vpop.permute.xlu0 %965
        %v968 = vunpack.c.l.b16 %v956
        %v969 = vpack.c.b16 %v968, %v968
        %970 = vrot.lane.b32.xlu0 %v969, 24
        %v971 = vpop.permute.xlu0 %970
        %vm972 = vcmask 64512
        %v975 = vsel %vm972, %v950, %v961
        %vm976 = vcmask 130048
        %v978 = vsel %vm976, %v975, %v966
        %vm979 = vcmask 195584
        %v981 = vsel %vm979, %v978, %v971
        %v982 = vld [vmem:[#allocation12] sm:$0xf]
        %v983 = vld [vmem:[#allocation12 + $0x4] sm:$0xf]
        %v984 = vld [vmem:[#allocation12 + $0x8] sm:$0xf]
        %v985 = vld [vmem:[#allocation12 + $0xc] sm:$0xf]
        %v986 = vld [vmem:[#allocation14] sm:$0x1]
        %v988 = vlaneseq
        %v989 = vshrl.u32 %v988, 7
        %v990 = vsub.s32 0, %v989
        %v991 = vrot.slane %v986, %v990
        %v997 = vunpack.c.l.b16 %v982
        %v998 = vunpack.c.l.b16 %v983
        %v999 = vunpack.c.l.b16 %v984
        %v1000 = vunpack.c.l.b16 %v985
        %v1001 = vpack.c.b16 %v998, %v997
        %v1002 = vpack.c.b16 %v1000, %v999
        %v1005 = vsel %vm655, %v981, 0
        %1007 = vmatprep.subr.bf16.mxu0 0
        %1008 = vmatpush1.bf16.msra.mxu0 0
        %1009 = vmatprep.subr.bf16.mxu0 0
        %1010 = vmatpush1.bf16.msra.mxu0 0
        %1011 = vmatprep.subr.bf16.mxu0 0
        %1012 = vmatpush1.bf16.msra.mxu0 0
        %1013 = vmatprep.subr.bf16.mxu0 0
        %1014 = vmatpush1.bf16.msra.mxu0 0
        %1015 = vmatprep.subr.bf16.mxu0 0
        %1016 = vmatpush1.bf16.msra.mxu0 0
        %1017 = vmatprep.subr.bf16.mxu0 0
        %1018 = vmatpush1.bf16.msra.mxu0 0
        %1019 = vmatprep.subr.bf16.mxu0 0
        %1020 = vmatpush1.bf16.msra.mxu0 %v1002
        %1021 = vmatprep.subr.bf16.mxu0 0
        %1022 = vmatpush1.bf16.msra.mxu0 %v1001
        %1023 = vmatprep.subr.bf16.mxu0 0
        %1024 = vmatpush2.bf16.msra.mxu0 0
        %1025 = vmatprep.subr.bf16.mxu0 0
        %1026 = vmatpush2.bf16.msra.mxu0 0
        %1027 = vmatprep.subr.bf16.mxu0 0
        %1028 = vmatpush2.bf16.msra.mxu0 0
        %1029 = vmatprep.subr.bf16.mxu0 0
        %1030 = vmatpush2.bf16.msra.mxu0 0
        %1031 = vmatprep.subr.bf16.mxu0 0
        %1032 = vmatpush2.bf16.msra.mxu0 0
        %1033 = vmatprep.subr.bf16.mxu0 0
        %1034 = vmatpush2.bf16.msra.mxu0 0
        %1035 = vmatprep.subr.bf16.mxu0 0
        %1036 = vmatpush2.bf16.msra.mxu0 0
        %1037 = vmatprep.subr.bf16.mxu0 0
        %1038 = vmatpush2.bf16.msra.mxu0 0
        %1039 = vmatprep.mubr.bf16.mxu0 0
        %1040 = vmatmul.mubr.bf16.gmra.mxu0 %v1005
        %v1041 = vpop.f32.mrf.mxu0
        %v1042 = vadd.f32 %v991, %v1041
        %v1043 = vpop.f32.mrf.mxu0
        %v1044 = vpop.f32.mrf.mxu0
        %v1045 = vpop.f32.mrf.mxu0
        %1046 = vdwg.mxu0
        %v1047 = vadd.f32 %v627, %v1042
        %v1048 = vld [vmem:[#allocation15] sm:$0x1]
        %v1049 = vld [vmem:[#allocation17] sm:$0x1]
        %v1050 = vsel %vm655, %v1047, 0.0
        %1051 = vadd.xlane.f32.xlu0 %v1050
        %v1052 = vpop.xlane.xlu0 %1051
        %v1053 = vrcp.pop 32.0
        %v1054 = vmul.f32 %v1052, %v1053
        %v1055 = vsub.f32 %v1047, %v1054
        %v1056 = vmul.f32 %v1055, %v1055
        %v1057 = vsel %vm655, %v1056, 0.0
        %1058 = vadd.xlane.f32.xlu0 %v1057
        %v1059 = vpop.xlane.xlu0 %1058
        %v1060 = vmul.f32 %v1059, %v1053
        %v1061 = vadd.f32 %v1060, 1e-05
        %v1062 = vrsqrt.pop %v1061
        %v1063 = vmul.f32 %v1055, %v1062
        %v1065 = vlaneseq
        %v1066 = vshrl.u32 %v1065, 7
        %v1067 = vsub.s32 0, %v1066
        %v1068 = vrot.slane %v1048, %v1067
        %v1070 = vmul.f32 %v1063, %v1068
        %v1072 = vlaneseq
        %v1073 = vshrl.u32 %v1072, 7
        %v1074 = vsub.s32 0, %v1073
        %v1075 = vrot.slane %v1049, %v1074
        %v1077 = vadd.f32 %v1070, %v1075
        %v1078 = vpack.c.bf16 %v1077, %v1077
        %v1079 = vld [vmem:[%s10] sm:$0xf]
        %v1080 = vld [vmem:[%s10 + $0x4] sm:$0xf]
        %v1081 = vld [vmem:[%s10 + $0x8] sm:$0xf]
        %v1082 = vld [vmem:[%s10 + $0xc] sm:$0xf]
        %v1083 = vld [vmem:[%s11] sm:$0x1]
        %v1085 = vlaneseq
        %v1086 = vshrl.u32 %v1085, 7
        %v1087 = vsub.s32 0, %v1086
        %v1088 = vrot.slane %v1083, %v1087
        %v1094 = vunpack.c.l.b16 %v1079
        %v1095 = vunpack.c.l.b16 %v1080
        %v1096 = vunpack.c.l.b16 %v1081
        %v1097 = vunpack.c.l.b16 %v1082
        %v1098 = vpack.c.b16 %v1095, %v1094
        %v1099 = vpack.c.b16 %v1097, %v1096
        %v1103 = vsel %vm655, %v1078, 0
        %1105 = vmatprep.subr.bf16.mxu0 0
        %1106 = vmatpush1.bf16.msra.mxu0 0
        %1107 = vmatprep.subr.bf16.mxu0 0
        %1108 = vmatpush1.bf16.msra.mxu0 0
        %1109 = vmatprep.subr.bf16.mxu0 0
        %1110 = vmatpush1.bf16.msra.mxu0 0
        %1111 = vmatprep.subr.bf16.mxu0 0
        %1112 = vmatpush1.bf16.msra.mxu0 0
        %1113 = vmatprep.subr.bf16.mxu0 0
        %1114 = vmatpush1.bf16.msra.mxu0 0
        %1115 = vmatprep.subr.bf16.mxu0 0
        %1116 = vmatpush1.bf16.msra.mxu0 0
        %1117 = vmatprep.subr.bf16.mxu0 0
        %1118 = vmatpush1.bf16.msra.mxu0 %v1099
        %1119 = vmatprep.subr.bf16.mxu0 0
        %1120 = vmatpush1.bf16.msra.mxu0 %v1098
        %1121 = vmatprep.subr.bf16.mxu0 0
        %1122 = vmatpush2.bf16.msra.mxu0 0
        %1123 = vmatprep.subr.bf16.mxu0 0
        %1124 = vmatpush2.bf16.msra.mxu0 0
        %1125 = vmatprep.subr.bf16.mxu0 0
        %1126 = vmatpush2.bf16.msra.mxu0 0
        %1127 = vmatprep.subr.bf16.mxu0 0
        %1128 = vmatpush2.bf16.msra.mxu0 0
        %1129 = vmatprep.subr.bf16.mxu0 0
        %1130 = vmatpush2.bf16.msra.mxu0 0
        %1131 = vmatprep.subr.bf16.mxu0 0
        %1132 = vmatpush2.bf16.msra.mxu0 0
        %1133 = vmatprep.subr.bf16.mxu0 0
        %1134 = vmatpush2.bf16.msra.mxu0 0
        %1135 = vmatprep.subr.bf16.mxu0 0
        %1136 = vmatpush2.bf16.msra.mxu0 0
        %1137 = vmatprep.mubr.bf16.mxu0 0
        %1138 = vmatmul.mubr.bf16.gmra.mxu0 %v1103
        %v1139 = vpop.f32.mrf.mxu0
        %v1140 = vadd.f32 %v1088, %v1139
        %v1141 = vpop.f32.mrf.mxu0
        %v1142 = vpop.f32.mrf.mxu0
        %v1143 = vpop.f32.mrf.mxu0
        %1144 = vdwg.mxu0
        %v1145 = vmax.f32 %v1140, 0.0
        %v1146 = vpack.c.bf16 %v1145, %v1145
        %v1147 = vld [vmem:[%s12] sm:$0xf]
        %v1148 = vld [vmem:[%s12 + $0x4] sm:$0xf]
        %v1149 = vld [vmem:[%s12 + $0x8] sm:$0xf]
        %v1150 = vld [vmem:[%s12 + $0xc] sm:$0xf]
        %v1151 = vld [vmem:[%s12 + $0x10] sm:$0xf]
        %v1152 = vld [vmem:[%s12 + $0x14] sm:$0xf]
        %v1153 = vld [vmem:[%s12 + $0x18] sm:$0xf]
        %v1154 = vld [vmem:[%s12 + $0x1c] sm:$0xf]
        %v1155 = vld [vmem:[%s13] sm:$0x1]
        %v1157 = vlaneseq
        %v1158 = vshrl.u32 %v1157, 7
        %v1159 = vsub.s32 0, %v1158
        %v1160 = vrot.slane %v1155, %v1159
        %v1170 = vunpack.c.l.b16 %v1147
        %v1171 = vunpack.c.l.b16 %v1148
        %v1172 = vunpack.c.l.b16 %v1149
        %v1173 = vunpack.c.l.b16 %v1150
        %v1174 = vunpack.c.l.b16 %v1151
        %v1175 = vunpack.c.l.b16 %v1152
        %v1176 = vunpack.c.l.b16 %v1153
        %v1177 = vunpack.c.l.b16 %v1154
        %v1178 = vpack.c.b16 %v1171, %v1170
        %v1179 = vpack.c.b16 %v1173, %v1172
        %v1180 = vpack.c.b16 %v1175, %v1174
        %v1181 = vpack.c.b16 %v1177, %v1176
        %vm1186 = vcmask 523264
        %v1188 = vsel %vm1186, %v1146, 0
        %1190 = vmatprep.subr.bf16.mxu0 0
        %1191 = vmatpush1.bf16.msra.mxu0 0
        %1192 = vmatprep.subr.bf16.mxu0 0
        %1193 = vmatpush1.bf16.msra.mxu0 0
        %1194 = vmatprep.subr.bf16.mxu0 0
        %1195 = vmatpush1.bf16.msra.mxu0 0
        %1196 = vmatprep.subr.bf16.mxu0 0
        %1197 = vmatpush1.bf16.msra.mxu0 0
        %1198 = vmatprep.subr.bf16.mxu0 0
        %1199 = vmatpush1.bf16.msra.mxu0 %v1181
        %1200 = vmatprep.subr.bf16.mxu0 0
        %1201 = vmatpush1.bf16.msra.mxu0 %v1180
        %1202 = vmatprep.subr.bf16.mxu0 0
        %1203 = vmatpush1.bf16.msra.mxu0 %v1179
        %1204 = vmatprep.subr.bf16.mxu0 0
        %1205 = vmatpush1.bf16.msra.mxu0 %v1178
        %1206 = vmatprep.subr.bf16.mxu0 0
        %1207 = vmatpush2.bf16.msra.mxu0 0
        %1208 = vmatprep.subr.bf16.mxu0 0
        %1209 = vmatpush2.bf16.msra.mxu0 0
        %1210 = vmatprep.subr.bf16.mxu0 0
        %1211 = vmatpush2.bf16.msra.mxu0 0
        %1212 = vmatprep.subr.bf16.mxu0 0
        %1213 = vmatpush2.bf16.msra.mxu0 0
        %1214 = vmatprep.subr.bf16.mxu0 0
        %1215 = vmatpush2.bf16.msra.mxu0 0
        %1216 = vmatprep.subr.bf16.mxu0 0
        %1217 = vmatpush2.bf16.msra.mxu0 0
        %1218 = vmatprep.subr.bf16.mxu0 0
        %1219 = vmatpush2.bf16.msra.mxu0 0
        %1220 = vmatprep.subr.bf16.mxu0 0
        %1221 = vmatpush2.bf16.msra.mxu0 0
        %1222 = vmatprep.mubr.bf16.mxu0 0
        %1223 = vmatmul.mubr.bf16.gmra.mxu0 %v1188
        %v1224 = vpop.f32.mrf.mxu0
        %v1225 = vadd.f32 %v1160, %v1224
        %v1226 = vpop.f32.mrf.mxu0
        %v1227 = vpop.f32.mrf.mxu0
        %v1228 = vpop.f32.mrf.mxu0
        %1229 = vdwg.mxu0
        %v1230 = vadd.f32 %v1077, %v1225
        %v1231 = vld [vmem:[%s14] sm:$0x1]
        %v1232 = vld [vmem:[%s15] sm:$0x1]
        %v1233 = vsel %vm655, %v1230, 0.0
        %1234 = vadd.xlane.f32.xlu0 %v1233
        %v1235 = vpop.xlane.xlu0 %1234
        %v1236 = vmul.f32 %v1235, %v1053
        %v1237 = vsub.f32 %v1230, %v1236
        %v1238 = vmul.f32 %v1237, %v1237
        %v1239 = vsel %vm655, %v1238, 0.0
        %1240 = vadd.xlane.f32.xlu0 %v1239
        %v1241 = vpop.xlane.xlu0 %1240
        %v1242 = vmul.f32 %v1241, %v1053
        %v1243 = vadd.f32 %v1242, 1e-05
        %v1244 = vrsqrt.pop %v1243
        %v1245 = vmul.f32 %v1237, %v1244
        %v1247 = vlaneseq
        %v1248 = vshrl.u32 %v1247, 7
        %v1249 = vsub.s32 0, %v1248
        %v1250 = vrot.slane %v1231, %v1249
        %v1252 = vmul.f32 %v1245, %v1250
        %v1254 = vlaneseq
        %v1255 = vshrl.u32 %v1254, 7
        %v1256 = vsub.s32 0, %v1255
        %v1257 = vrot.slane %v1232, %v1256
        %v1259 = vadd.f32 %v1252, %v1257
        %1260 = vst.msk [vmem:[%s617] sm:$0xff] %vm655, %v1259
        %s1261 = sand.u32 %s388, 1
        %s1262 = scalar_lea.sflag [#allocation8], %s1261
        %s1263 = sand.u32 %s388, 1
        %s1264 = smul.addr %s1263, 8
        %s1265 = scalar_lea.vmem [#allocation18], %s1264
        // Predicated region
        $region120: #{tpu_custom_call.1} parent=83 // pred_check
          %p1266 = pneg %p398
        $region121: #{tpu_custom_call.1} parent=83 // pred_check_branch
          %1268 = sbr.rel (%p1266) target = $region123
        $region122: #{tpu_custom_call.1} parent=83 // pred_region
          %s1270 = ssub.s32 128, 128
          %1271 = vsyncadd %s1262, %s1270
          %s1272 = smul.addr %s34, 128
          %s1273 = scalar_lea.hbm %s16, %s1272
          %s1275 = sshll.u32 %s1265, 4
          %s1276 = int_to_ptr.vmem [resolvable:$true] %s1275
          %1278 = dma.vmem_to_hbm [thread:$0]  %s1276, 128, %s1273, %s1262
        $region123: #{tpu_custom_call.1} parent=83 // pred_fallthru
          _
      $region84: #{tpu_custom_call.1} parent=5 // pred_fallthru
        _
      %p1279 = scmp.le.s32.totalorder 2, %s29
      // Predicated region
      $region124: #{tpu_custom_call.1} parent=5 // pred_check
        %p1280 = pneg %p1279
      $region125: #{tpu_custom_call.1} parent=5 // pred_check_branch
        %1282 = sbr.rel (%p1280) target = $region127
      $region126: #{tpu_custom_call.1} parent=5 // pred_region
        %s1283 = ssub.s32 %s29, 2
        // Predicated region
        $region128: #{tpu_custom_call.1} parent=126 // pred_check
          %p1284 = pneg %p404
        $region129: #{tpu_custom_call.1} parent=126 // pred_check_branch
          %1286 = sbr.rel (%p1284) target = $region131
        $region130: #{tpu_custom_call.1} parent=126 // pred_region
          %s1287 = sand.u32 %s389, 1
          %s1288 = scalar_lea.sflag [#allocation8], %s1287
          %s1289 = sand.u32 %s389, 1
          %s1290 = smul.addr %s1289, 8
          %s1291 = scalar_lea.vmem [#allocation18], %s1290
          %1292 = dma.done %s1288, 128
        $region131: #{tpu_custom_call.1} parent=126 // pred_fallthru
          _
      $region127: #{tpu_custom_call.1} parent=5 // pred_fallthru
        _
    $region6: #{tpu_custom_call.1} parent=1 // loop_footer
      %s33 = sadd.s32 1, %s29
    $region7: #{tpu_custom_call.1} parent=1 // loop_footer_branch
      %28 = sbr.rel target = $region3
    $region8: #{tpu_custom_call.1} parent=1 // loop_exit
      _
    %1293 = vsyncpa [#allocation7], 1
    %s1294 = scalar_lea.sflag [#allocation7], 1
    %1295 = vsyncpa %s1294, 1
    %1296 = vsyncpa [#allocation10], 1
    %1297 = vsyncpa [#allocation13], 1
    %1298 = vsyncpa [#allocation16], 1
    %1299 = vsyncpa [#allocation8], 1
    %s1300 = scalar_lea.sflag [#allocation8], 1
    %1301 = vsyncpa %s1300, 1

</llo_original>
